<compile_context>
chip_gen: v7x
topology: tpu7x:2x2x1
jax: 0.10.0
libtpu: 0.0.40
codegen_flags: <defaults>
</compile_context>

<pallas_src>
import functools

import jax
import jax.numpy as jnp
from jax import lax
from jax.experimental import pallas as pl
from jax.experimental.pallas import tpu as pltpu


# ----------------------------------------------------------------------------
# Fused Signed_GAT kernel: adjacency + head layer (ELU) + out layer + sigmoid.
# All operands are single full-array VMEM blocks (grid=(1,)).
# ----------------------------------------------------------------------------
def _signed_gat_kernel(emb_ref, orig_ref, cos_ref,
                       w1_ref, a1h_ref, a2h_ref, wt1h_ref, wt2h_ref,
                       w2_ref, a1o_ref, a2o_ref, wt1o_ref, wt2o_ref,
                       o_ref, *, alpha):
    f32 = jnp.float32
    bf16 = jnp.bfloat16
    N = orig_ref.shape[0]

    # --- adjacency (fused, never touches HBM):
    #     adj = (original_adj + (cosmatrix > 0.5)) > 0
    pot = jnp.where(cos_ref[...] > 0.5, 1.0, 0.0).astype(f32)
    mask = (orig_ref[...] + pot) > 0.0                                  # bool [N, N]

    neg_big = jnp.float32(-1e12)

    def row_softmax(z):
        m = jnp.max(z, axis=1, keepdims=True)
        p = jnp.exp(z - m)
        denom = jnp.sum(p, axis=1, keepdims=True)
        return p * pl.reciprocal(denom, approx=True)                    # EUP vrcp

    def gat_layer(x, w, a1, a2, wt1, wt2, concat):
        # h = x @ W   (bf16 MXU inputs, f32 accumulation)
        h = jnp.dot(x.astype(bf16), w[...], preferred_element_type=f32)  # [N, PD]

        # attention logits e[i, j] = leakyrelu((h @ a1)_i + (h @ a2)_j)
        # kept in f32 (tiny work, feeds exp).  wh2 is produced directly in row
        # orientation to avoid an awkward [N,1]->[1,N] relayout.
        wh1 = jnp.sum(h * a1[...], axis=1, keepdims=True)                # [N, 1]
        wh2 = lax.dot_general(a2[...], h, (((1,), (1,)), ((), ())),
                              preferred_element_type=f32)                # [1, N]
        e = wh1 + wh2                                                    # [N, N]
        e = jnp.where(e > 0, e, alpha * e)                               # LeakyReLU

        att = row_softmax(jnp.where(mask, e, neg_big))                   # softmax(e)
        att_neg = -row_softmax(jnp.where(mask, -e, neg_big))             # -softmax(-e)
        # dropout p = 0 in this module -> identity.

        # Both attention applications in ONE MXU matmul: [2N, N] @ [N, PD].
        p_stack = jnp.concatenate([att, att_neg], axis=0)                # [2N, N]
        hp = jnp.dot(p_stack.astype(bf16), x.astype(bf16),
                     preferred_element_type=f32)                         # [2N, PD]

        # cat([h', h'_neg], 1) @ wtrans == h' @ wtrans[:D] + h'_neg @ wtrans[D:]
        new_h = (jnp.dot(hp[:N].astype(bf16), wt1[...],
                         preferred_element_type=f32)
                 + jnp.dot(hp[N:].astype(bf16), wt2[...],
                           preferred_element_type=f32))                  # [N, PD]

        if concat:  # F.elu (alpha=1.0); clamp avoids exp overflow of the
            # discarded positive branch (value identical on the selected one).
            new_h = jnp.where(new_h > 0, new_h,
                              jnp.exp(jnp.minimum(new_h, 0.0)) - 1.0)
        return new_h

    x0 = emb_ref[...]                                                    # bf16 [N, PD]
    x1 = gat_layer(x0, w1_ref, a1h_ref, a2h_ref, wt1h_ref, wt2h_ref, True)
    x2 = gat_layer(x1, w2_ref, a1o_ref, a2o_ref, wt1o_ref, wt2o_ref, False)

    # fused F.sigmoid of Signed_GAT; padded columns become 0.5 and are sliced
    # off in the wrapper.
    o_ref[...] = (1.0 / (1.0 + jnp.exp(-x2))).astype(o_ref.dtype)


# ----------------------------------------------------------------------------
# Wrapper: parameter padding / splitting, single pallas_call, final gather.
# ----------------------------------------------------------------------------
def signed_gat_forward(params, node_embedding, cosmatrix, original_adj, X_tid,
                       *, alpha=0.3):
    # NOTE: the reference code calls Embedding.from_pretrained() as an instance
    # method and discards the result, so the embedding table actually used is
    # the freshly-initialized nn.Embedding weight (padding_idx=0 row zeroed),
    # not `node_embedding`.  We mirror that with params["embedding"].
    del node_embedding
    emb = params["embedding"].astype(jnp.float32)
    N, D = emb.shape
    assert len(params["heads"]) == 1, \
        "reference wtrans shape only supports nb_heads == 1"
    PD = ((D + 127) // 128) * 128          # lane-dense padded feature width

    def _pad(m, rows, cols):
        z = jnp.zeros((rows, cols), jnp.float32)
        return z.at[: m.shape[0], : m.shape[1]].set(m.astype(jnp.float32))

    def _prep(p):
        dout = p["W"].shape[1]
        W = _pad(p["W"], PD, PD).astype(jnp.bfloat16)
        a1 = _pad(p["a"][:dout, :].T, 1, PD)                  # f32 [1, PD]
        a2 = _pad(p["a"][dout:, :].T, 1, PD)                  # f32 [1, PD]
        wt1 = _pad(p["wtrans"][:dout, :], PD, PD).astype(jnp.bfloat16)
        wt2 = _pad(p["wtrans"][dout:, :], PD, PD).astype(jnp.bfloat16)
        return W, a1, a2, wt1, wt2

    w1, a1h, a2h, wt1h, wt2h = _prep(params["heads"][0])
    w2, a1o, a2o, wt1o, wt2o = _prep(params["out"])

    emb_p = _pad(emb, N, PD).astype(jnp.bfloat16)
    orig = original_adj.astype(jnp.float32)
    cos = cosmatrix.astype(jnp.float32)

    full = lambda shape: pl.BlockSpec(shape, lambda i: (0,) * len(shape))
    kernel = functools.partial(_signed_gat_kernel, alpha=alpha)

    out_pad = pl.pallas_call(
        kernel,
        out_shape=jax.ShapeDtypeStruct((N, PD), jnp.float32),
        grid=(1,),
        in_specs=[full((N, PD)), full((N, N)), full((N, N)),
                  full((PD, PD)), full((1, PD)), full((1, PD)),
                  full((PD, PD)), full((PD, PD)),
                  full((PD, PD)), full((1, PD)), full((1, PD)),
                  full((PD, PD)), full((PD, PD))],
        out_specs=full((N, PD)),
        compiler_params=pltpu.CompilerParams(
            dimension_semantics=("arbitrary",)),
    )(emb_p, orig, cos, w1, a1h, a2h, wt1h, wt2h, w2, a1o, a2o, wt1o, wt2o)

    out = out_pad[:, :D]
    return out, jnp.take(out, X_tid, axis=0)


# ----------------------------------------------------------------------------
# Pure-JAX f32 reference (mirrors the PyTorch module) for validation.
# ----------------------------------------------------------------------------
def _reference_forward(params, cosmatrix, original_adj, X_tid, *, alpha=0.3):
    X = params["embedding"].astype(jnp.float32)
    adj = (original_adj.astype(jnp.float32)
           + (cosmatrix > 0.5).astype(jnp.float32)) > 0

    def layer(x, W, a, wtrans, concat):
        h = x @ W
        dout = W.shape[1]
        wh1 = h @ a[:dout]
        wh2 = h @ a[dout:]
        e = wh1 + wh2.T
        e = jnp.where(e > 0, e, alpha * e)
        zv = jnp.full_like(e, -1e12)
        att = jax.nn.softmax(jnp.where(adj, e, zv), axis=1)
        natt = -jax.nn.softmax(jnp.where(adj, -e, zv), axis=1)
        hp = att @ x
        hpn = natt @ x
        nh = jnp.concatenate([hp, hpn], axis=1) @ wtrans
        return jax.nn.elu(nh) if concat else nh

    hd = params["heads"][0]
    x = layer(X, hd["W"], hd["a"], hd["wtrans"], True)
    o = params["out"]
    out = jax.nn.sigmoid(layer(x, o["W"], o["a"], o["wtrans"], False))
    return out, out[X_tid]


def xavier_uniform(key, shape, gain=1.414):
    fan_in, fan_out = shape[0], shape[1]
    bound = gain * (6.0 / (fan_in + fan_out)) ** 0.5
    return jax.random.uniform(key, shape, jnp.float32, -bound, bound)


if __name__ == "__main__":
    N, D = 64, 32          # node_num, embedding_dim
    nb_heads = 1
    key = jax.random.PRNGKey(0)
    ks = jax.random.split(key, 10)

    node_embedding = jax.random.normal(ks[0], (N, D), jnp.float32)
    cosmatrix = jax.random.uniform(ks[1], (N, N), jnp.float32)
    original_adj = (jax.random.uniform(ks[2], (N, N)) > 0.8).astype(jnp.float32)
    X_tid = jnp.arange(8, dtype=jnp.int32)

    emb = jax.random.normal(ks[3], (N, D), jnp.float32)
    emb = emb.at[0].set(0.0)            # padding_idx = 0

    params = {
        "embedding": emb,
        "heads": [{
            "W": xavier_uniform(ks[4], (D, D)),
            "a": xavier_uniform(ks[5], (2 * D, 1)),
            "wtrans": xavier_uniform(ks[6], (2 * D, D)),
        }],
        "out": {
            "W": xavier_uniform(ks[7], (D * nb_heads, D)),
            "a": xavier_uniform(ks[8], (2 * D, 1)),
            "wtrans": xavier_uniform(ks[9], (2 * D, D)),
        },
    }

    fwd = jax.jit(signed_gat_forward)
    out_full, out_sel = fwd(params, node_embedding, cosmatrix, original_adj,
                            X_tid)
    jax.block_until_ready((out_full, out_sel))
    assert out_full.shape == (N, D) and out_sel.shape == (8, D)

    # Validate against the pure-JAX f32 reference (tolerance covers bf16 MXU
    # inputs and the approx softmax reciprocal; outputs are post-sigmoid).
    ref_full, ref_sel = _reference_forward(params, cosmatrix, original_adj,
                                           X_tid)
    max_err = float(jnp.max(jnp.abs(out_full - ref_full)))
    assert max_err < 5e-2, f"max |err| vs f32 reference = {max_err}"

    print("KERNEL_OK")
</pallas_src>

<mosaic_0001>
module attributes {stable_mosaic.version = 11 : i64} {
  func.func @_signed_gat_kernel(%arg0: i32, %arg1: memref<64x128xbf16, #tpu.memory_space<vmem>>, %arg2: memref<64x64xf32, #tpu.memory_space<vmem>>, %arg3: memref<64x64xf32, #tpu.memory_space<vmem>>, %arg4: memref<128x128xbf16, #tpu.memory_space<vmem>>, %arg5: memref<1x128xf32, #tpu.memory_space<vmem>>, %arg6: memref<1x128xf32, #tpu.memory_space<vmem>>, %arg7: memref<128x128xbf16, #tpu.memory_space<vmem>>, %arg8: memref<128x128xbf16, #tpu.memory_space<vmem>>, %arg9: memref<128x128xbf16, #tpu.memory_space<vmem>>, %arg10: memref<1x128xf32, #tpu.memory_space<vmem>>, %arg11: memref<1x128xf32, #tpu.memory_space<vmem>>, %arg12: memref<128x128xbf16, #tpu.memory_space<vmem>>, %arg13: memref<128x128xbf16, #tpu.memory_space<vmem>>, %arg14: memref<64x128xf32, #tpu.memory_space<vmem>>) attributes {dimension_semantics = [#tpu.dimension_semantics<arbitrary>], iteration_bounds = array<i64: 1>, scalar_prefetch = 0 : i64, scratch_operands = 0 : i64, tpu.core_type = #tpu.core_type<tc>, window_params = [{pipeline_mode = #tpu.pipeline_mode<synchronous>, transform_indices = @transform_0, window_bounds = array<i64: 64, 128>}, {pipeline_mode = #tpu.pipeline_mode<synchronous>, transform_indices = @transform_1, window_bounds = array<i64: 64, 64>}, {pipeline_mode = #tpu.pipeline_mode<synchronous>, transform_indices = @transform_2, window_bounds = array<i64: 64, 64>}, {pipeline_mode = #tpu.pipeline_mode<synchronous>, transform_indices = @transform_3, window_bounds = array<i64: 128, 128>}, {pipeline_mode = #tpu.pipeline_mode<synchronous>, transform_indices = @transform_4, window_bounds = array<i64: 1, 128>}, {pipeline_mode = #tpu.pipeline_mode<synchronous>, transform_indices = @transform_5, window_bounds = array<i64: 1, 128>}, {pipeline_mode = #tpu.pipeline_mode<synchronous>, transform_indices = @transform_6, window_bounds = array<i64: 128, 128>}, {pipeline_mode = #tpu.pipeline_mode<synchronous>, transform_indices = @transform_7, window_bounds = array<i64: 128, 128>}, {pipeline_mode = #tpu.pipeline_mode<synchronous>, transform_indices = @transform_8, window_bounds = array<i64: 128, 128>}, {pipeline_mode = #tpu.pipeline_mode<synchronous>, transform_indices = @transform_9, window_bounds = array<i64: 1, 128>}, {pipeline_mode = #tpu.pipeline_mode<synchronous>, transform_indices = @transform_10, window_bounds = array<i64: 1, 128>}, {pipeline_mode = #tpu.pipeline_mode<synchronous>, transform_indices = @transform_11, window_bounds = array<i64: 128, 128>}, {pipeline_mode = #tpu.pipeline_mode<synchronous>, transform_indices = @transform_12, window_bounds = array<i64: 128, 128>}, {pipeline_mode = #tpu.pipeline_mode<synchronous>, transform_indices = @transform_13, window_bounds = array<i64: 64, 128>}]} {
    %c0 = arith.constant 0 : index
    %c0_0 = arith.constant 0 : index
    %0 = vector.load %arg3[%c0, %c0_0] : memref<64x64xf32, #tpu.memory_space<vmem>>, vector<64x64xf32>
    %cst = arith.constant 5.000000e-01 : f32
    %1 = vector.broadcast %cst : f32 to vector<64x64xf32>
    %2 = arith.cmpf ogt, %0, %1 : vector<64x64xf32>
    %cst_1 = arith.constant 1.000000e+00 : f32
    %cst_2 = arith.constant 0.000000e+00 : f32
    %3 = vector.broadcast %cst_1 : f32 to vector<64x64xf32>
    %4 = vector.broadcast %cst_2 : f32 to vector<64x64xf32>
    %5 = arith.select %2, %3, %4 : vector<64x64xi1>, vector<64x64xf32>
    %c0_3 = arith.constant 0 : index
    %c0_4 = arith.constant 0 : index
    %6 = vector.load %arg2[%c0_3, %c0_4] : memref<64x64xf32, #tpu.memory_space<vmem>>, vector<64x64xf32>
    %7 = arith.addf %6, %5 : vector<64x64xf32>
    %cst_5 = arith.constant 0.000000e+00 : f32
    %8 = vector.broadcast %cst_5 : f32 to vector<64x64xf32>
    %9 = arith.cmpf ogt, %7, %8 : vector<64x64xf32>
    %c0_6 = arith.constant 0 : index
    %c0_7 = arith.constant 0 : index
    %10 = vector.load %arg1[%c0_6, %c0_7] : memref<64x128xbf16, #tpu.memory_space<vmem>>, vector<64x128xbf16>
    %c0_8 = arith.constant 0 : index
    %c0_9 = arith.constant 0 : index
    %11 = vector.load %arg4[%c0_8, %c0_9] : memref<128x128xbf16, #tpu.memory_space<vmem>>, vector<128x128xbf16>
    %cst_10 = arith.constant dense<0.000000e+00> : vector<64x128xf32>
    %12 = tpu.matmul %10, %11, %cst_10 {dimension_numbers = #tpu.dot_dimension_numbers<[1], [0], [0], [1], [0, 0, 1, 1], [], []>} : vector<64x128xbf16>, vector<128x128xbf16>, vector<64x128xf32> -> vector<64x128xf32>
    %c0_11 = arith.constant 0 : index
    %c0_12 = arith.constant 0 : index
    %13 = vector.load %arg5[%c0_11, %c0_12] : memref<1x128xf32, #tpu.memory_space<vmem>>, vector<1x128xf32>
    %14 = vector.broadcast %13 : vector<1x128xf32> to vector<64x128xf32>
    %15 = arith.mulf %12, %14 : vector<64x128xf32>
    %cst_13 = arith.constant dense<0.000000e+00> : vector<64xf32>
    %16 = vector.multi_reduction <add>, %15, %cst_13 [1] : vector<64x128xf32> to vector<64xf32>
    %17 = vector.shape_cast %16 : vector<64xf32> to vector<64x1xf32>
    %c0_14 = arith.constant 0 : index
    %c0_15 = arith.constant 0 : index
    %18 = vector.load %arg6[%c0_14, %c0_15] : memref<1x128xf32, #tpu.memory_space<vmem>>, vector<1x128xf32>
    %cst_16 = arith.constant dense<0.000000e+00> : vector<1x64xf32>
    %19 = tpu.matmul %18, %12, %cst_16 {dimension_numbers = #tpu.dot_dimension_numbers<[1], [1], [0], [0], [0, 0, 1, 0], [], []>} : vector<1x128xf32>, vector<64x128xf32>, vector<1x64xf32> -> vector<1x64xf32>
    %20 = vector.broadcast %17 : vector<64x1xf32> to vector<64x64xf32>
    %21 = vector.broadcast %19 : vector<1x64xf32> to vector<64x64xf32>
    %22 = arith.addf %20, %21 : vector<64x64xf32>
    %cst_17 = arith.constant 0.000000e+00 : f32
    %23 = vector.broadcast %cst_17 : f32 to vector<64x64xf32>
    %24 = arith.cmpf ogt, %22, %23 : vector<64x64xf32>
    %cst_18 = arith.constant 3.000000e-01 : f32
    %25 = vector.broadcast %cst_18 : f32 to vector<64x64xf32>
    %26 = arith.mulf %25, %22 : vector<64x64xf32>
    %27 = arith.select %24, %22, %26 : vector<64x64xi1>, vector<64x64xf32>
    %cst_19 = arith.constant -9.99999995E+11 : f32
    %28 = vector.broadcast %cst_19 : f32 to vector<64x64xf32>
    %29 = arith.select %9, %27, %28 : vector<64x64xi1>, vector<64x64xf32>
    %cst_20 = arith.constant dense<0xFF800000> : vector<64xf32>
    %30 = vector.multi_reduction <maximumf>, %29, %cst_20 [1] : vector<64x64xf32> to vector<64xf32>
    %31 = vector.shape_cast %30 : vector<64xf32> to vector<64x1xf32>
    %32 = vector.broadcast %31 : vector<64x1xf32> to vector<64x64xf32>
    %33 = arith.subf %29, %32 : vector<64x64xf32>
    %34 = math.exp %33 : vector<64x64xf32>
    %cst_21 = arith.constant dense<0.000000e+00> : vector<64xf32>
    %35 = vector.multi_reduction <add>, %34, %cst_21 [1] : vector<64x64xf32> to vector<64xf32>
    %36 = vector.shape_cast %35 : vector<64xf32> to vector<64x1xf32>
    %37 = tpu.reciprocal %36 {approx = true} : vector<64x1xf32> -> vector<64x1xf32>
    %38 = vector.broadcast %37 : vector<64x1xf32> to vector<64x64xf32>
    %39 = arith.mulf %34, %38 : vector<64x64xf32>
    %cst_22 = arith.constant 0.000000e+00 : f32
    %40 = vector.broadcast %cst_22 : f32 to vector<64x64xf32>
    %41 = arith.subf %40, %27 : vector<64x64xf32>
    %cst_23 = arith.constant -9.99999995E+11 : f32
    %42 = vector.broadcast %cst_23 : f32 to vector<64x64xf32>
    %43 = arith.select %9, %41, %42 : vector<64x64xi1>, vector<64x64xf32>
    %cst_24 = arith.constant dense<0xFF800000> : vector<64xf32>
    %44 = vector.multi_reduction <maximumf>, %43, %cst_24 [1] : vector<64x64xf32> to vector<64xf32>
    %45 = vector.shape_cast %44 : vector<64xf32> to vector<64x1xf32>
    %46 = vector.broadcast %45 : vector<64x1xf32> to vector<64x64xf32>
    %47 = arith.subf %43, %46 : vector<64x64xf32>
    %48 = math.exp %47 : vector<64x64xf32>
    %cst_25 = arith.constant dense<0.000000e+00> : vector<64xf32>
    %49 = vector.multi_reduction <add>, %48, %cst_25 [1] : vector<64x64xf32> to vector<64xf32>
    %50 = vector.shape_cast %49 : vector<64xf32> to vector<64x1xf32>
    %51 = tpu.reciprocal %50 {approx = true} : vector<64x1xf32> -> vector<64x1xf32>
    %52 = vector.broadcast %51 : vector<64x1xf32> to vector<64x64xf32>
    %53 = arith.mulf %48, %52 : vector<64x64xf32>
    %cst_26 = arith.constant 0.000000e+00 : f32
    %54 = vector.broadcast %cst_26 : f32 to vector<64x64xf32>
    %55 = arith.subf %54, %53 : vector<64x64xf32>
    %56 = tpu.concatenate %39, %55 in 0 : vector<64x64xf32>, vector<64x64xf32> -> vector<128x64xf32>
    %57 = arith.truncf %56 : vector<128x64xf32> to vector<128x64xbf16>
    %cst_27 = arith.constant dense<0.000000e+00> : vector<128x128xf32>
    %58 = tpu.matmul %57, %10, %cst_27 {dimension_numbers = #tpu.dot_dimension_numbers<[1], [0], [0], [1], [0, 0, 1, 1], [], []>} : vector<128x64xbf16>, vector<64x128xbf16>, vector<128x128xf32> -> vector<128x128xf32>
    %59 = vector.extract_strided_slice %58 {offsets = [0, 0], sizes = [64, 128], strides = [1, 1]} : vector<128x128xf32> to vector<64x128xf32>
    %60 = arith.truncf %59 : vector<64x128xf32> to vector<64x128xbf16>
    %c0_28 = arith.constant 0 : index
    %c0_29 = arith.constant 0 : index
    %61 = vector.load %arg7[%c0_28, %c0_29] : memref<128x128xbf16, #tpu.memory_space<vmem>>, vector<128x128xbf16>
    %cst_30 = arith.constant dense<0.000000e+00> : vector<64x128xf32>
    %62 = tpu.matmul %60, %61, %cst_30 {dimension_numbers = #tpu.dot_dimension_numbers<[1], [0], [0], [1], [0, 0, 1, 1], [], []>} : vector<64x128xbf16>, vector<128x128xbf16>, vector<64x128xf32> -> vector<64x128xf32>
    %63 = vector.extract_strided_slice %58 {offsets = [64, 0], sizes = [64, 128], strides = [1, 1]} : vector<128x128xf32> to vector<64x128xf32>
    %64 = arith.truncf %63 : vector<64x128xf32> to vector<64x128xbf16>
    %c0_31 = arith.constant 0 : index
    %c0_32 = arith.constant 0 : index
    %65 = vector.load %arg8[%c0_31, %c0_32] : memref<128x128xbf16, #tpu.memory_space<vmem>>, vector<128x128xbf16>
    %cst_33 = arith.constant dense<0.000000e+00> : vector<64x128xf32>
    %66 = tpu.matmul %64, %65, %cst_33 {dimension_numbers = #tpu.dot_dimension_numbers<[1], [0], [0], [1], [0, 0, 1, 1], [], []>} : vector<64x128xbf16>, vector<128x128xbf16>, vector<64x128xf32> -> vector<64x128xf32>
    %67 = arith.addf %62, %66 : vector<64x128xf32>
    %cst_34 = arith.constant 0.000000e+00 : f32
    %68 = vector.broadcast %cst_34 : f32 to vector<64x128xf32>
    %69 = arith.cmpf ogt, %67, %68 : vector<64x128xf32>
    %cst_35 = arith.constant 0.000000e+00 : f32
    %70 = vector.broadcast %cst_35 : f32 to vector<64x128xf32>
    %71 = arith.minimumf %67, %70 : vector<64x128xf32>
    %72 = math.exp %71 : vector<64x128xf32>
    %cst_36 = arith.constant 1.000000e+00 : f32
    %73 = vector.broadcast %cst_36 : f32 to vector<64x128xf32>
    %74 = arith.subf %72, %73 : vector<64x128xf32>
    %75 = arith.select %69, %67, %74 : vector<64x128xi1>, vector<64x128xf32>
    %76 = arith.truncf %75 : vector<64x128xf32> to vector<64x128xbf16>
    %c0_37 = arith.constant 0 : index
    %c0_38 = arith.constant 0 : index
    %77 = vector.load %arg9[%c0_37, %c0_38] : memref<128x128xbf16, #tpu.memory_space<vmem>>, vector<128x128xbf16>
    %cst_39 = arith.constant dense<0.000000e+00> : vector<64x128xf32>
    %78 = tpu.matmul %76, %77, %cst_39 {dimension_numbers = #tpu.dot_dimension_numbers<[1], [0], [0], [1], [0, 0, 1, 1], [], []>} : vector<64x128xbf16>, vector<128x128xbf16>, vector<64x128xf32> -> vector<64x128xf32>
    %c0_40 = arith.constant 0 : index
    %c0_41 = arith.constant 0 : index
    %79 = vector.load %arg10[%c0_40, %c0_41] : memref<1x128xf32, #tpu.memory_space<vmem>>, vector<1x128xf32>
    %80 = vector.broadcast %79 : vector<1x128xf32> to vector<64x128xf32>
    %81 = arith.mulf %78, %80 : vector<64x128xf32>
    %cst_42 = arith.constant dense<0.000000e+00> : vector<64xf32>
    %82 = vector.multi_reduction <add>, %81, %cst_42 [1] : vector<64x128xf32> to vector<64xf32>
    %83 = vector.shape_cast %82 : vector<64xf32> to vector<64x1xf32>
    %c0_43 = arith.constant 0 : index
    %c0_44 = arith.constant 0 : index
    %84 = vector.load %arg11[%c0_43, %c0_44] : memref<1x128xf32, #tpu.memory_space<vmem>>, vector<1x128xf32>
    %cst_45 = arith.constant dense<0.000000e+00> : vector<1x64xf32>
    %85 = tpu.matmul %84, %78, %cst_45 {dimension_numbers = #tpu.dot_dimension_numbers<[1], [1], [0], [0], [0, 0, 1, 0], [], []>} : vector<1x128xf32>, vector<64x128xf32>, vector<1x64xf32> -> vector<1x64xf32>
    %86 = vector.broadcast %83 : vector<64x1xf32> to vector<64x64xf32>
    %87 = vector.broadcast %85 : vector<1x64xf32> to vector<64x64xf32>
    %88 = arith.addf %86, %87 : vector<64x64xf32>
    %cst_46 = arith.constant 0.000000e+00 : f32
    %89 = vector.broadcast %cst_46 : f32 to vector<64x64xf32>
    %90 = arith.cmpf ogt, %88, %89 : vector<64x64xf32>
    %cst_47 = arith.constant 3.000000e-01 : f32
    %91 = vector.broadcast %cst_47 : f32 to vector<64x64xf32>
    %92 = arith.mulf %91, %88 : vector<64x64xf32>
    %93 = arith.select %90, %88, %92 : vector<64x64xi1>, vector<64x64xf32>
    %cst_48 = arith.constant -9.99999995E+11 : f32
    %94 = vector.broadcast %cst_48 : f32 to vector<64x64xf32>
    %95 = arith.select %9, %93, %94 : vector<64x64xi1>, vector<64x64xf32>
    %cst_49 = arith.constant dense<0xFF800000> : vector<64xf32>
    %96 = vector.multi_reduction <maximumf>, %95, %cst_49 [1] : vector<64x64xf32> to vector<64xf32>
    %97 = vector.shape_cast %96 : vector<64xf32> to vector<64x1xf32>
    %98 = vector.broadcast %97 : vector<64x1xf32> to vector<64x64xf32>
    %99 = arith.subf %95, %98 : vector<64x64xf32>
    %100 = math.exp %99 : vector<64x64xf32>
    %cst_50 = arith.constant dense<0.000000e+00> : vector<64xf32>
    %101 = vector.multi_reduction <add>, %100, %cst_50 [1] : vector<64x64xf32> to vector<64xf32>
    %102 = vector.shape_cast %101 : vector<64xf32> to vector<64x1xf32>
    %103 = tpu.reciprocal %102 {approx = true} : vector<64x1xf32> -> vector<64x1xf32>
    %104 = vector.broadcast %103 : vector<64x1xf32> to vector<64x64xf32>
    %105 = arith.mulf %100, %104 : vector<64x64xf32>
    %cst_51 = arith.constant 0.000000e+00 : f32
    %106 = vector.broadcast %cst_51 : f32 to vector<64x64xf32>
    %107 = arith.subf %106, %93 : vector<64x64xf32>
    %cst_52 = arith.constant -9.99999995E+11 : f32
    %108 = vector.broadcast %cst_52 : f32 to vector<64x64xf32>
    %109 = arith.select %9, %107, %108 : vector<64x64xi1>, vector<64x64xf32>
    %cst_53 = arith.constant dense<0xFF800000> : vector<64xf32>
    %110 = vector.multi_reduction <maximumf>, %109, %cst_53 [1] : vector<64x64xf32> to vector<64xf32>
    %111 = vector.shape_cast %110 : vector<64xf32> to vector<64x1xf32>
    %112 = vector.broadcast %111 : vector<64x1xf32> to vector<64x64xf32>
    %113 = arith.subf %109, %112 : vector<64x64xf32>
    %114 = math.exp %113 : vector<64x64xf32>
    %cst_54 = arith.constant dense<0.000000e+00> : vector<64xf32>
    %115 = vector.multi_reduction <add>, %114, %cst_54 [1] : vector<64x64xf32> to vector<64xf32>
    %116 = vector.shape_cast %115 : vector<64xf32> to vector<64x1xf32>
    %117 = tpu.reciprocal %116 {approx = true} : vector<64x1xf32> -> vector<64x1xf32>
    %118 = vector.broadcast %117 : vector<64x1xf32> to vector<64x64xf32>
    %119 = arith.mulf %114, %118 : vector<64x64xf32>
    %cst_55 = arith.constant 0.000000e+00 : f32
    %120 = vector.broadcast %cst_55 : f32 to vector<64x64xf32>
    %121 = arith.subf %120, %119 : vector<64x64xf32>
    %122 = tpu.concatenate %105, %121 in 0 : vector<64x64xf32>, vector<64x64xf32> -> vector<128x64xf32>
    %123 = arith.truncf %122 : vector<128x64xf32> to vector<128x64xbf16>
    %124 = arith.truncf %75 : vector<64x128xf32> to vector<64x128xbf16>
    %cst_56 = arith.constant dense<0.000000e+00> : vector<128x128xf32>
    %125 = tpu.matmul %123, %124, %cst_56 {dimension_numbers = #tpu.dot_dimension_numbers<[1], [0], [0], [1], [0, 0, 1, 1], [], []>} : vector<128x64xbf16>, vector<64x128xbf16>, vector<128x128xf32> -> vector<128x128xf32>
    %126 = vector.extract_strided_slice %125 {offsets = [0, 0], sizes = [64, 128], strides = [1, 1]} : vector<128x128xf32> to vector<64x128xf32>
    %127 = arith.truncf %126 : vector<64x128xf32> to vector<64x128xbf16>
    %c0_57 = arith.constant 0 : index
    %c0_58 = arith.constant 0 : index
    %128 = vector.load %arg12[%c0_57, %c0_58] : memref<128x128xbf16, #tpu.memory_space<vmem>>, vector<128x128xbf16>
    %cst_59 = arith.constant dense<0.000000e+00> : vector<64x128xf32>
    %129 = tpu.matmul %127, %128, %cst_59 {dimension_numbers = #tpu.dot_dimension_numbers<[1], [0], [0], [1], [0, 0, 1, 1], [], []>} : vector<64x128xbf16>, vector<128x128xbf16>, vector<64x128xf32> -> vector<64x128xf32>
    %130 = vector.extract_strided_slice %125 {offsets = [64, 0], sizes = [64, 128], strides = [1, 1]} : vector<128x128xf32> to vector<64x128xf32>
    %131 = arith.truncf %130 : vector<64x128xf32> to vector<64x128xbf16>
    %c0_60 = arith.constant 0 : index
    %c0_61 = arith.constant 0 : index
    %132 = vector.load %arg13[%c0_60, %c0_61] : memref<128x128xbf16, #tpu.memory_space<vmem>>, vector<128x128xbf16>
    %cst_62 = arith.constant dense<0.000000e+00> : vector<64x128xf32>
    %133 = tpu.matmul %131, %132, %cst_62 {dimension_numbers = #tpu.dot_dimension_numbers<[1], [0], [0], [1], [0, 0, 1, 1], [], []>} : vector<64x128xbf16>, vector<128x128xbf16>, vector<64x128xf32> -> vector<64x128xf32>
    %134 = arith.addf %129, %133 : vector<64x128xf32>
    %cst_63 = arith.constant 0.000000e+00 : f32
    %135 = vector.broadcast %cst_63 : f32 to vector<64x128xf32>
    %136 = arith.subf %135, %134 : vector<64x128xf32>
    %137 = math.exp %136 : vector<64x128xf32>
    %cst_64 = arith.constant 1.000000e+00 : f32
    %138 = vector.broadcast %cst_64 : f32 to vector<64x128xf32>
    %139 = arith.addf %138, %137 : vector<64x128xf32>
    %cst_65 = arith.constant 1.000000e+00 : f32
    %140 = vector.broadcast %cst_65 : f32 to vector<64x128xf32>
    %141 = arith.divf %140, %139 : vector<64x128xf32>
    %c0_66 = arith.constant 0 : index
    %c0_67 = arith.constant 0 : index
    %142 = vector.load %arg14[%c0_66, %c0_67] : memref<64x128xf32, #tpu.memory_space<vmem>>, vector<64x128xf32>
    tpu.vector_store %arg14[%c0_66, %c0_67], %141 {strides = array<i32>} : memref<64x128xf32, #tpu.memory_space<vmem>>, vector<64x128xf32>,
    return
  }
  func.func @transform_0(%arg0: i32) -> (i32, i32) {
    %c0_i32 = arith.constant 0 : i32
    %c0_i32_0 = arith.constant 0 : i32
    %c0_i32_1 = arith.constant 0 : i32
    return %c0_i32, %c0_i32_0 : i32, i32
  }
  func.func @transform_1(%arg0: i32) -> (i32, i32) {
    %c0_i32 = arith.constant 0 : i32
    %c0_i32_0 = arith.constant 0 : i32
    %c0_i32_1 = arith.constant 0 : i32
    return %c0_i32, %c0_i32_0 : i32, i32
  }
  func.func @transform_2(%arg0: i32) -> (i32, i32) {
    %c0_i32 = arith.constant 0 : i32
    %c0_i32_0 = arith.constant 0 : i32
    %c0_i32_1 = arith.constant 0 : i32
    return %c0_i32, %c0_i32_0 : i32, i32
  }
  func.func @transform_3(%arg0: i32) -> (i32, i32) {
    %c0_i32 = arith.constant 0 : i32
    %c0_i32_0 = arith.constant 0 : i32
    %c0_i32_1 = arith.constant 0 : i32
    return %c0_i32, %c0_i32_0 : i32, i32
  }
  func.func @transform_4(%arg0: i32) -> (i32, i32) {
    %c0_i32 = arith.constant 0 : i32
    %c0_i32_0 = arith.constant 0 : i32
    %c0_i32_1 = arith.constant 0 : i32
    return %c0_i32, %c0_i32_0 : i32, i32
  }
  func.func @transform_5(%arg0: i32) -> (i32, i32) {
    %c0_i32 = arith.constant 0 : i32
    %c0_i32_0 = arith.constant 0 : i32
    %c0_i32_1 = arith.constant 0 : i32
    return %c0_i32, %c0_i32_0 : i32, i32
  }
  func.func @transform_6(%arg0: i32) -> (i32, i32) {
    %c0_i32 = arith.constant 0 : i32
    %c0_i32_0 = arith.constant 0 : i32
    %c0_i32_1 = arith.constant 0 : i32
    return %c0_i32, %c0_i32_0 : i32, i32
  }
  func.func @transform_7(%arg0: i32) -> (i32, i32) {
    %c0_i32 = arith.constant 0 : i32
    %c0_i32_0 = arith.constant 0 : i32
    %c0_i32_1 = arith.constant 0 : i32
    return %c0_i32, %c0_i32_0 : i32, i32
  }
  func.func @transform_8(%arg0: i32) -> (i32, i32) {
    %c0_i32 = arith.constant 0 : i32
    %c0_i32_0 = arith.constant 0 : i32
    %c0_i32_1 = arith.constant 0 : i32
    return %c0_i32, %c0_i32_0 : i32, i32
  }
  func.func @transform_9(%arg0: i32) -> (i32, i32) {
    %c0_i32 = arith.constant 0 : i32
    %c0_i32_0 = arith.constant 0 : i32
    %c0_i32_1 = arith.constant 0 : i32
    return %c0_i32, %c0_i32_0 : i32, i32
  }
  func.func @transform_10(%arg0: i32) -> (i32, i32) {
    %c0_i32 = arith.constant 0 : i32
    %c0_i32_0 = arith.constant 0 : i32
    %c0_i32_1 = arith.constant 0 : i32
    return %c0_i32, %c0_i32_0 : i32, i32
  }
  func.func @transform_11(%arg0: i32) -> (i32, i32) {
    %c0_i32 = arith.constant 0 : i32
    %c0_i32_0 = arith.constant 0 : i32
    %c0_i32_1 = arith.constant 0 : i32
    return %c0_i32, %c0_i32_0 : i32, i32
  }
  func.func @transform_12(%arg0: i32) -> (i32, i32) {
    %c0_i32 = arith.constant 0 : i32
    %c0_i32_0 = arith.constant 0 : i32
    %c0_i32_1 = arith.constant 0 : i32
    return %c0_i32, %c0_i32_0 : i32, i32
  }
  func.func @transform_13(%arg0: i32) -> (i32, i32) {
    %c0_i32 = arith.constant 0 : i32
    %c0_i32_0 = arith.constant 0 : i32
    %c0_i32_1 = arith.constant 0 : i32
    return %c0_i32, %c0_i32_0 : i32, i32
  }
}

</mosaic_0001>

<llo_original>
// kernel: signed_gat_forward.1
$region0: #{signed_gat_forward.1}
  #allocation0 [shape = 'u32[]', space=smem, size = 0x4, offset = 0x4, fixed_abs, tag = 'smem constant byte address 0x4 - core index']
  #allocation1 [shape = 'u32[144,128]{1,0:T(1,128)}', space=vmem, size = 0x12000, scoped, tag = 'internal scratch']
  %s0 = inlined_call_operand.vmem [shape: bf16[64,128], index: 0, kind: input, shape index: {}]
  %s1 = inlined_call_operand.vmem [shape: f32[64,64], index: 1, kind: input, shape index: {}]
  %s2 = inlined_call_operand.vmem [shape: f32[64,64], index: 2, kind: input, shape index: {}]
  %s3 = inlined_call_operand.vmem [shape: bf16[128,128], index: 3, kind: input, shape index: {}]
  %s4 = inlined_call_operand.vmem [shape: f32[1,128], index: 4, kind: input, shape index: {}]
  %s5 = inlined_call_operand.vmem [shape: f32[1,128], index: 5, kind: input, shape index: {}]
  %s6 = inlined_call_operand.vmem [shape: bf16[128,128], index: 6, kind: input, shape index: {}]
  %s7 = inlined_call_operand.vmem [shape: bf16[128,128], index: 7, kind: input, shape index: {}]
  %s8 = inlined_call_operand.vmem [shape: bf16[128,128], index: 8, kind: input, shape index: {}]
  %s9 = inlined_call_operand.vmem [shape: f32[1,128], index: 9, kind: input, shape index: {}]
  %s10 = inlined_call_operand.vmem [shape: f32[1,128], index: 10, kind: input, shape index: {}]
  %s11 = inlined_call_operand.vmem [shape: bf16[128,128], index: 11, kind: input, shape index: {}]
  %s12 = inlined_call_operand.vmem [shape: bf16[128,128], index: 12, kind: input, shape index: {}]
  %s13 = inlined_call_operand.vmem [shape: f32[64,128], index: 13, kind: output, shape index: {}]
  %s14 = sld [smem:[#allocation0]]
  $region62: #{signed_gat_forward.1} parent=0
    _
  %s16 = ssub.s32 1, %s14
  %s17 = scalar_select 0, %s16, %s14
  // Predicated region
  $region2: #{signed_gat_forward.1} parent=0 // pred_check
    _
  $region3: #{signed_gat_forward.1} parent=0 // pred_check_branch
    %19 = sbr.rel (0) target = $region5
  $region4: #{signed_gat_forward.1} parent=0 // pred_region
    _
  $region5: #{signed_gat_forward.1} parent=0 // pred_fallthru
    _
  // Predicated region
  $region6: #{signed_gat_forward.1} parent=0 // pred_check
    _
  $region7: #{signed_gat_forward.1} parent=0 // pred_check_branch
    %21 = sbr.rel (0) target = $region9
  $region8: #{signed_gat_forward.1} parent=0 // pred_region
    _
  $region9: #{signed_gat_forward.1} parent=0 // pred_fallthru
    _
  // Predicated region
  $region10: #{signed_gat_forward.1} parent=0 // pred_check
    _
  $region11: #{signed_gat_forward.1} parent=0 // pred_check_branch
    %23 = sbr.rel (0) target = $region13
  $region12: #{signed_gat_forward.1} parent=0 // pred_region
    _
  $region13: #{signed_gat_forward.1} parent=0 // pred_fallthru
    _
  // Predicated region
  $region14: #{signed_gat_forward.1} parent=0 // pred_check
    _
  $region15: #{signed_gat_forward.1} parent=0 // pred_check_branch
    %25 = sbr.rel (0) target = $region17
  $region16: #{signed_gat_forward.1} parent=0 // pred_region
    _
  $region17: #{signed_gat_forward.1} parent=0 // pred_fallthru
    _
  // Predicated region
  $region18: #{signed_gat_forward.1} parent=0 // pred_check
    _
  $region19: #{signed_gat_forward.1} parent=0 // pred_check_branch
    %27 = sbr.rel (0) target = $region21
  $region20: #{signed_gat_forward.1} parent=0 // pred_region
    _
  $region21: #{signed_gat_forward.1} parent=0 // pred_fallthru
    _
  // Predicated region
  $region22: #{signed_gat_forward.1} parent=0 // pred_check
    _
  $region23: #{signed_gat_forward.1} parent=0 // pred_check_branch
    %29 = sbr.rel (0) target = $region25
  $region24: #{signed_gat_forward.1} parent=0 // pred_region
    _
  $region25: #{signed_gat_forward.1} parent=0 // pred_fallthru
    _
  // Predicated region
  $region26: #{signed_gat_forward.1} parent=0 // pred_check
    _
  $region27: #{signed_gat_forward.1} parent=0 // pred_check_branch
    %31 = sbr.rel (0) target = $region29
  $region28: #{signed_gat_forward.1} parent=0 // pred_region
    _
  $region29: #{signed_gat_forward.1} parent=0 // pred_fallthru
    _
  // Predicated region
  $region30: #{signed_gat_forward.1} parent=0 // pred_check
    _
  $region31: #{signed_gat_forward.1} parent=0 // pred_check_branch
    %33 = sbr.rel (0) target = $region33
  $region32: #{signed_gat_forward.1} parent=0 // pred_region
    _
  $region33: #{signed_gat_forward.1} parent=0 // pred_fallthru
    _
  // Predicated region
  $region34: #{signed_gat_forward.1} parent=0 // pred_check
    _
  $region35: #{signed_gat_forward.1} parent=0 // pred_check_branch
    %35 = sbr.rel (0) target = $region37
  $region36: #{signed_gat_forward.1} parent=0 // pred_region
    _
  $region37: #{signed_gat_forward.1} parent=0 // pred_fallthru
    _
  // Predicated region
  $region38: #{signed_gat_forward.1} parent=0 // pred_check
    _
  $region39: #{signed_gat_forward.1} parent=0 // pred_check_branch
    %37 = sbr.rel (0) target = $region41
  $region40: #{signed_gat_forward.1} parent=0 // pred_region
    _
  $region41: #{signed_gat_forward.1} parent=0 // pred_fallthru
    _
  // Predicated region
  $region42: #{signed_gat_forward.1} parent=0 // pred_check
    _
  $region43: #{signed_gat_forward.1} parent=0 // pred_check_branch
    %39 = sbr.rel (0) target = $region45
  $region44: #{signed_gat_forward.1} parent=0 // pred_region
    _
  $region45: #{signed_gat_forward.1} parent=0 // pred_fallthru
    _
  // Predicated region
  $region46: #{signed_gat_forward.1} parent=0 // pred_check
    _
  $region47: #{signed_gat_forward.1} parent=0 // pred_check_branch
    %41 = sbr.rel (0) target = $region49
  $region48: #{signed_gat_forward.1} parent=0 // pred_region
    _
  $region49: #{signed_gat_forward.1} parent=0 // pred_fallthru
    _
  // Predicated region
  $region50: #{signed_gat_forward.1} parent=0 // pred_check
    _
  $region51: #{signed_gat_forward.1} parent=0 // pred_check_branch
    %43 = sbr.rel (0) target = $region53
  $region52: #{signed_gat_forward.1} parent=0 // pred_region
    _
  $region53: #{signed_gat_forward.1} parent=0 // pred_fallthru
    _
  %v45 = vld [vmem:[%s2] sm:$0xff]
  %v46 = vld [vmem:[%s2 + $0x8] sm:$0xff]
  %v47 = vld [vmem:[%s2 + $0x10] sm:$0xff]
  %v48 = vld [vmem:[%s2 + $0x18] sm:$0xff]
  %v49 = vld [vmem:[%s2 + $0x20] sm:$0xff]
  %v50 = vld [vmem:[%s2 + $0x28] sm:$0xff]
  %v51 = vld [vmem:[%s2 + $0x30] sm:$0xff]
  %v52 = vld [vmem:[%s2 + $0x38] sm:$0xff]
  %vm53 = vcmp.gt.f32.partialorder %v45, 0.5
  %vm54 = vcmp.gt.f32.partialorder %v46, 0.5
  %vm55 = vcmp.gt.f32.partialorder %v47, 0.5
  %vm56 = vcmp.gt.f32.partialorder %v48, 0.5
  %vm57 = vcmp.gt.f32.partialorder %v49, 0.5
  %vm58 = vcmp.gt.f32.partialorder %v50, 0.5
  %vm59 = vcmp.gt.f32.partialorder %v51, 0.5
  %vm60 = vcmp.gt.f32.partialorder %v52, 0.5
  %v61 = vsel %vm53, 1.0, 0.0
  %v62 = vsel %vm54, 1.0, 0.0
  %v63 = vsel %vm55, 1.0, 0.0
  %v64 = vsel %vm56, 1.0, 0.0
  %v65 = vsel %vm57, 1.0, 0.0
  %v66 = vsel %vm58, 1.0, 0.0
  %v67 = vsel %vm59, 1.0, 0.0
  %v68 = vsel %vm60, 1.0, 0.0
  %v69 = vld [vmem:[%s1] sm:$0xff]
  %v70 = vld [vmem:[%s1 + $0x8] sm:$0xff]
  %v71 = vld [vmem:[%s1 + $0x10] sm:$0xff]
  %v72 = vld [vmem:[%s1 + $0x18] sm:$0xff]
  %v73 = vld [vmem:[%s1 + $0x20] sm:$0xff]
  %v74 = vld [vmem:[%s1 + $0x28] sm:$0xff]
  %v75 = vld [vmem:[%s1 + $0x30] sm:$0xff]
  %v76 = vld [vmem:[%s1 + $0x38] sm:$0xff]
  %v77 = vadd.f32 %v69, %v61
  %v78 = vadd.f32 %v70, %v62
  %v79 = vadd.f32 %v71, %v63
  %v80 = vadd.f32 %v72, %v64
  %v81 = vadd.f32 %v73, %v65
  %v82 = vadd.f32 %v74, %v66
  %v83 = vadd.f32 %v75, %v67
  %v84 = vadd.f32 %v76, %v68
  %vm85 = vcmp.gt.f32.partialorder %v77, 0.0
  %vm86 = vcmp.gt.f32.partialorder %v78, 0.0
  %vm87 = vcmp.gt.f32.partialorder %v79, 0.0
  %vm88 = vcmp.gt.f32.partialorder %v80, 0.0
  %vm89 = vcmp.gt.f32.partialorder %v81, 0.0
  %vm90 = vcmp.gt.f32.partialorder %v82, 0.0
  %vm91 = vcmp.gt.f32.partialorder %v83, 0.0
  %vm92 = vcmp.gt.f32.partialorder %v84, 0.0
  %v93 = vld [vmem:[%s0] sm:$0xf]
  %v94 = vld [vmem:[%s0 + $0x4] sm:$0xf]
  %v95 = vld [vmem:[%s0 + $0x8] sm:$0xf]
  %v96 = vld [vmem:[%s0 + $0xc] sm:$0xf]
  %v97 = vld [vmem:[%s0 + $0x10] sm:$0xf]
  %v98 = vld [vmem:[%s0 + $0x14] sm:$0xf]
  %v99 = vld [vmem:[%s0 + $0x18] sm:$0xf]
  %v100 = vld [vmem:[%s0 + $0x1c] sm:$0xf]
  %v101 = vld [vmem:[%s3] sm:$0xf]
  %v102 = vld [vmem:[%s3 + $0x4] sm:$0xf]
  %v103 = vld [vmem:[%s3 + $0x8] sm:$0xf]
  %v104 = vld [vmem:[%s3 + $0xc] sm:$0xf]
  %v105 = vld [vmem:[%s3 + $0x10] sm:$0xf]
  %v106 = vld [vmem:[%s3 + $0x14] sm:$0xf]
  %v107 = vld [vmem:[%s3 + $0x18] sm:$0xf]
  %v108 = vld [vmem:[%s3 + $0x1c] sm:$0xf]
  %v109 = vld [vmem:[%s3 + $0x20] sm:$0xf]
  %v110 = vld [vmem:[%s3 + $0x24] sm:$0xf]
  %v111 = vld [vmem:[%s3 + $0x28] sm:$0xf]
  %v112 = vld [vmem:[%s3 + $0x2c] sm:$0xf]
  %v113 = vld [vmem:[%s3 + $0x30] sm:$0xf]
  %v114 = vld [vmem:[%s3 + $0x34] sm:$0xf]
  %v115 = vld [vmem:[%s3 + $0x38] sm:$0xf]
  %v116 = vld [vmem:[%s3 + $0x3c] sm:$0xf]
  %v125 = vunpack.c.l.b16 %v93
  %v126 = vunpack.c.l.b16 %v94
  %v127 = vunpack.c.l.b16 %v95
  %v128 = vunpack.c.l.b16 %v96
  %v129 = vunpack.c.l.b16 %v97
  %v130 = vunpack.c.l.b16 %v98
  %v131 = vunpack.c.l.b16 %v99
  %v132 = vunpack.c.l.b16 %v100
  %v133 = vpack.c.b16 %v126, %v125
  %v134 = vpack.c.b16 %v128, %v127
  %v135 = vpack.c.b16 %v130, %v129
  %v136 = vpack.c.b16 %v132, %v131
  %v157 = vunpack.c.l.b16 %v101
  %v158 = vunpack.c.l.b16 %v102
  %v159 = vunpack.c.l.b16 %v103
  %v160 = vunpack.c.l.b16 %v104
  %v161 = vunpack.c.l.b16 %v105
  %v162 = vunpack.c.l.b16 %v106
  %v163 = vunpack.c.l.b16 %v107
  %v164 = vunpack.c.l.b16 %v108
  %v165 = vunpack.c.l.b16 %v109
  %v166 = vunpack.c.l.b16 %v110
  %v167 = vunpack.c.l.b16 %v111
  %v168 = vunpack.c.l.b16 %v112
  %v169 = vunpack.c.l.b16 %v113
  %v170 = vunpack.c.l.b16 %v114
  %v171 = vunpack.c.l.b16 %v115
  %v172 = vunpack.c.l.b16 %v116
  %v173 = vpack.c.b16 %v158, %v157
  %v174 = vpack.c.b16 %v160, %v159
  %v175 = vpack.c.b16 %v162, %v161
  %v176 = vpack.c.b16 %v164, %v163
  %v177 = vpack.c.b16 %v166, %v165
  %v178 = vpack.c.b16 %v168, %v167
  %v179 = vpack.c.b16 %v170, %v169
  %v180 = vpack.c.b16 %v172, %v171
  %189 = vmatprep.subr.bf16.mxu0 0
  %190 = vmatpush1.bf16.msra.mxu0 %v173
  %191 = vmatprep.subr.bf16.mxu0 0
  %192 = vmatpush1.bf16.msra.mxu0 %v174
  %193 = vmatprep.subr.bf16.mxu0 0
  %194 = vmatpush1.bf16.msra.mxu0 %v175
  %195 = vmatprep.subr.bf16.mxu0 0
  %196 = vmatpush1.bf16.msra.mxu0 %v176
  %197 = vmatprep.subr.bf16.mxu0 0
  %198 = vmatpush1.bf16.msra.mxu0 %v177
  %199 = vmatprep.subr.bf16.mxu0 0
  %200 = vmatpush1.bf16.msra.mxu0 %v178
  %201 = vmatprep.subr.bf16.mxu0 0
  %202 = vmatpush1.bf16.msra.mxu0 %v179
  %203 = vmatprep.subr.bf16.mxu0 0
  %204 = vmatpush1.bf16.msra.mxu0 %v180
  %205 = vmatprep.subr.bf16.mxu0 0
  %206 = vmatpush1.bf16.msra.mxu0 0
  %207 = vmatprep.subr.bf16.mxu0 0
  %208 = vmatpush1.bf16.msra.mxu0 0
  %209 = vmatprep.subr.bf16.mxu0 0
  %210 = vmatpush1.bf16.msra.mxu0 0
  %211 = vmatprep.subr.bf16.mxu0 0
  %212 = vmatpush1.bf16.msra.mxu0 0
  %213 = vmatprep.subr.bf16.mxu0 0
  %214 = vmatpush1.bf16.msra.mxu0 0
  %215 = vmatprep.subr.bf16.mxu0 0
  %216 = vmatpush1.bf16.msra.mxu0 0
  %217 = vmatprep.subr.bf16.mxu0 0
  %218 = vmatpush1.bf16.msra.mxu0 0
  %219 = vmatprep.subr.bf16.mxu0 0
  %220 = vmatpush1.bf16.msra.mxu0 0
  %221 = vmatprep.mubr.bf16.mxu0 0
  %222 = vmatmul.mubr.bf16.gmra.mrb[0].mxu0 %v133
  %v223 = vpop.f32.mrb[0].mxu0
  %v224 = vadd.f32 0.0, %v223
  %v225 = vpop.f32.mrb[0].mxu0
  %v226 = vpop.f32.mrb[0].mxu0
  %v227 = vadd.f32 0.0, %v226
  %v228 = vpop.f32.mrb[0].mxu0
  %229 = vmatprep.mubr.bf16.mxu0 0
  %230 = vmatmul.mubr.bf16.gmra.mrb[0].mxu0 %v134
  %v231 = vpop.f32.mrb[0].mxu0
  %v232 = vadd.f32 0.0, %v231
  %v233 = vpop.f32.mrb[0].mxu0
  %v234 = vpop.f32.mrb[0].mxu0
  %v235 = vadd.f32 0.0, %v234
  %v236 = vpop.f32.mrb[0].mxu0
  %237 = vmatprep.mubr.bf16.mxu0 0
  %238 = vmatmul.mubr.bf16.gmra.mrb[0].mxu0 %v135
  %v239 = vpop.f32.mrb[0].mxu0
  %v240 = vadd.f32 0.0, %v239
  %v241 = vpop.f32.mrb[0].mxu0
  %v242 = vpop.f32.mrb[0].mxu0
  %v243 = vadd.f32 0.0, %v242
  %v244 = vpop.f32.mrb[0].mxu0
  %245 = vmatprep.mubr.bf16.mxu0 0
  %246 = vmatmul.mubr.bf16.gmra.mrb[0].mxu0 %v136
  %v247 = vpop.f32.mrb[0].mxu0
  %v248 = vadd.f32 0.0, %v247
  %v249 = vpop.f32.mrb[0].mxu0
  %v250 = vpop.f32.mrb[0].mxu0
  %v251 = vadd.f32 0.0, %v250
  %v252 = vpop.f32.mrb[0].mxu0
  %253 = vdwg.mxu0
  %v254 = vld [vmem:[%s4] sm:$0x1]
  %v256 = vlaneseq
  %v257 = vshrl.u32 %v256, 7
  %v258 = vsub.s32 0, %v257
  %v259 = vrot.slane %v254, %v258
  %v261 = vmul.f32 %v224, %v259
  %v262 = vmul.f32 %v227, %v259
  %v263 = vmul.f32 %v232, %v259
  %v264 = vmul.f32 %v235, %v259
  %v265 = vmul.f32 %v240, %v259
  %v266 = vmul.f32 %v243, %v259
  %v267 = vmul.f32 %v248, %v259
  %v268 = vmul.f32 %v251, %v259
  %269 = vadd.xlane.f32.xlu0 %v261
  %v270 = vpop.xlane.xlu0 %269
  %271 = vadd.xlane.f32.xlu0 %v262
  %v272 = vpop.xlane.xlu0 %271
  %273 = vadd.xlane.f32.xlu0 %v263
  %v274 = vpop.xlane.xlu0 %273
  %275 = vadd.xlane.f32.xlu0 %v264
  %v276 = vpop.xlane.xlu0 %275
  %277 = vadd.xlane.f32.xlu0 %v265
  %v278 = vpop.xlane.xlu0 %277
  %279 = vadd.xlane.f32.xlu0 %v266
  %v280 = vpop.xlane.xlu0 %279
  %281 = vadd.xlane.f32.xlu0 %v267
  %v282 = vpop.xlane.xlu0 %281
  %283 = vadd.xlane.f32.xlu0 %v268
  %v284 = vpop.xlane.xlu0 %283
  %v285 = vld [vmem:[%s5] sm:$0x1]
  %286 = vmatprep.subr.mxu0 0.0
  %287 = vmatpush1.xpose.msra.mxu0 %v224
  %288 = vmatprep.subr.mxu0 0.0
  %289 = vmatpush1.xpose.msra.mxu0 %v227
  %290 = vmatprep.subr.mxu0 0.0
  %291 = vmatpush1.xpose.msra.mxu0 %v232
  %292 = vmatprep.subr.mxu0 0.0
  %293 = vmatpush1.xpose.msra.mxu0 %v235
  %294 = vmatprep.subr.mxu0 0.0
  %295 = vmatpush1.xpose.msra.mxu0 %v240
  %296 = vmatprep.subr.mxu0 0.0
  %297 = vmatpush1.xpose.msra.mxu0 %v243
  %298 = vmatprep.subr.mxu0 0.0
  %299 = vmatpush1.xpose.msra.mxu0 %v248
  %300 = vmatprep.subr.mxu0 0.0
  %301 = vmatpush1.xpose.msra.mxu0 %v251
  %302 = vmatprep.subr.mxu0 0.0
  %303 = vmatpush1.xpose.msra.mxu0 0.0
  %304 = vmatprep.subr.mxu0 0.0
  %305 = vmatpush1.xpose.msra.mxu0 0.0
  %306 = vmatprep.subr.mxu0 0.0
  %307 = vmatpush1.xpose.msra.mxu0 0.0
  %308 = vmatprep.subr.mxu0 0.0
  %309 = vmatpush1.xpose.msra.mxu0 0.0
  %310 = vmatprep.subr.mxu0 0.0
  %311 = vmatpush1.xpose.msra.mxu0 0.0
  %312 = vmatprep.subr.mxu0 0.0
  %313 = vmatpush1.xpose.msra.mxu0 0.0
  %314 = vmatprep.subr.mxu0 0.0
  %315 = vmatpush1.xpose.msra.mxu0 0.0
  %316 = vmatprep.subr.mxu0 0.0
  %317 = vmatpush1.xpose.msra.mxu0 0.0
  %318 = vmatprep.subr.mxu0 0.0
  %319 = vmatpush1.xpose.msra.mxu0 0.0
  %320 = vmatprep.subr.mxu0 0.0
  %321 = vmatpush1.xpose.msra.mxu0 0.0
  %322 = vmatprep.subr.mxu0 0.0
  %323 = vmatpush1.xpose.msra.mxu0 0.0
  %324 = vmatprep.subr.mxu0 0.0
  %325 = vmatpush1.xpose.msra.mxu0 0.0
  %326 = vmatprep.subr.mxu0 0.0
  %327 = vmatpush1.xpose.msra.mxu0 0.0
  %328 = vmatprep.subr.mxu0 0.0
  %329 = vmatpush1.xpose.msra.mxu0 0.0
  %330 = vmatprep.subr.mxu0 0.0
  %331 = vmatpush1.xpose.msra.mxu0 0.0
  %332 = vmatprep.subr.mxu0 0.0
  %333 = vmatpush1.xpose.msra.mxu0 0.0
  %334 = vmatprep.subr.mxu0 0.0
  %335 = vmatpush1.xpose.msra.mxu0 0.0
  %336 = vmatprep.subr.mxu0 0.0
  %337 = vmatpush1.xpose.msra.mxu0 0.0
  %338 = vmatprep.subr.mxu0 0.0
  %339 = vmatpush1.xpose.msra.mxu0 0.0
  %340 = vmatprep.subr.mxu0 0.0
  %341 = vmatpush1.xpose.msra.mxu0 0.0
  %342 = vmatprep.subr.mxu0 0.0
  %343 = vmatpush1.xpose.msra.mxu0 0.0
  %344 = vmatprep.subr.mxu0 0.0
  %345 = vmatpush1.xpose.msra.mxu0 0.0
  %346 = vmatprep.subr.mxu0 0.0
  %347 = vmatpush1.xpose.msra.mxu0 0.0
  %348 = vmatprep.subr.mxu0 0.0
  %349 = vmatpush1.xpose.msra.mxu0 0.0
  %350 = vmatprep.mubr.f32.mxu0 0.0
  %351 = vmatmul.mubr.f32.gmra.mrb[0].mxu0 %v285
  %v352 = vpop.f32.mrb[0].mxu0
  %v353 = vadd.f32 0.0, %v352
  %v354 = vpop.f32.mrb[0].mxu0
  %355 = vdwg.mxu0
  %v356 = vlaneseq
  %v357 = vshrl.u32 %v356, 7
  %v358 = vsub.s32 0, %v357
  %v359 = vrot.slane %v353, %v358
  %v360 = vadd.f32 %v270, %v359
  %v361 = vadd.f32 %v272, %v359
  %v362 = vadd.f32 %v274, %v359
  %v363 = vadd.f32 %v276, %v359
  %v364 = vadd.f32 %v278, %v359
  %v365 = vadd.f32 %v280, %v359
  %v366 = vadd.f32 %v282, %v359
  %v367 = vadd.f32 %v284, %v359
  %vm368 = vcmp.gt.f32.partialorder %v360, 0.0
  %vm369 = vcmp.gt.f32.partialorder %v361, 0.0
  %vm370 = vcmp.gt.f32.partialorder %v362, 0.0
  %vm371 = vcmp.gt.f32.partialorder %v363, 0.0
  %vm372 = vcmp.gt.f32.partialorder %v364, 0.0
  %vm373 = vcmp.gt.f32.partialorder %v365, 0.0
  %vm374 = vcmp.gt.f32.partialorder %v366, 0.0
  %vm375 = vcmp.gt.f32.partialorder %v367, 0.0
  %v376 = vmul.f32 %v360, 0.3
  %v377 = vmul.f32 %v361, 0.3
  %v378 = vmul.f32 %v362, 0.3
  %v379 = vmul.f32 %v363, 0.3
  %v380 = vmul.f32 %v364, 0.3
  %v381 = vmul.f32 %v365, 0.3
  %v382 = vmul.f32 %v366, 0.3
  %v383 = vmul.f32 %v367, 0.3
  %v384 = vsel %vm368, %v360, %v376
  %v385 = vsel %vm369, %v361, %v377
  %v386 = vsel %vm370, %v362, %v378
  %v387 = vsel %vm371, %v363, %v379
  %v388 = vsel %vm372, %v364, %v380
  %v389 = vsel %vm373, %v365, %v381
  %v390 = vsel %vm374, %v366, %v382
  %v391 = vsel %vm375, %v367, %v383
  %v392 = vsel %vm85, %v384, -1e+12
  %v393 = vsel %vm86, %v385, -1e+12
  %v394 = vsel %vm87, %v386, -1e+12
  %v395 = vsel %vm88, %v387, -1e+12
  %v396 = vsel %vm89, %v388, -1e+12
  %v397 = vsel %vm90, %v389, -1e+12
  %v398 = vsel %vm91, %v390, -1e+12
  %v399 = vsel %vm92, %v391, -1e+12
  %vm400 = vcmask 523264
  %v401 = vsel %vm400, %v392, -inf
  %402 = vmax.xlane.f32.xlu0 %v401
  %v403 = vpop.xlane.xlu0 %402
  %v404 = vsel %vm400, %v393, -inf
  %405 = vmax.xlane.f32.xlu0 %v404
  %v406 = vpop.xlane.xlu0 %405
  %v407 = vsel %vm400, %v394, -inf
  %408 = vmax.xlane.f32.xlu0 %v407
  %v409 = vpop.xlane.xlu0 %408
  %v410 = vsel %vm400, %v395, -inf
  %411 = vmax.xlane.f32.xlu0 %v410
  %v412 = vpop.xlane.xlu0 %411
  %v413 = vsel %vm400, %v396, -inf
  %414 = vmax.xlane.f32.xlu0 %v413
  %v415 = vpop.xlane.xlu0 %414
  %v416 = vsel %vm400, %v397, -inf
  %417 = vmax.xlane.f32.xlu0 %v416
  %v418 = vpop.xlane.xlu0 %417
  %v419 = vsel %vm400, %v398, -inf
  %420 = vmax.xlane.f32.xlu0 %v419
  %v421 = vpop.xlane.xlu0 %420
  %v422 = vsel %vm400, %v399, -inf
  %423 = vmax.xlane.f32.xlu0 %v422
  %v424 = vpop.xlane.xlu0 %423
  %v425 = vsub.f32 %v392, %v403
  %v426 = vsub.f32 %v393, %v406
  %v427 = vsub.f32 %v394, %v409
  %v428 = vsub.f32 %v395, %v412
  %v429 = vsub.f32 %v396, %v415
  %v430 = vsub.f32 %v397, %v418
  %v431 = vsub.f32 %v398, %v421
  %v432 = vsub.f32 %v399, %v424
  %v433 = vmul.f32 %v425, 1.442695
  %v434 = vpow.pop %v433
  %v435 = vmul.f32 %v426, 1.442695
  %v436 = vpow.pop %v435
  %v437 = vmul.f32 %v427, 1.442695
  %v438 = vpow.pop %v437
  %v439 = vmul.f32 %v428, 1.442695
  %v440 = vpow.pop %v439
  %v441 = vmul.f32 %v429, 1.442695
  %v442 = vpow.pop %v441
  %v443 = vmul.f32 %v430, 1.442695
  %v444 = vpow.pop %v443
  %v445 = vmul.f32 %v431, 1.442695
  %v446 = vpow.pop %v445
  %v447 = vmul.f32 %v432, 1.442695
  %v448 = vpow.pop %v447
  %v449 = vsel %vm400, %v434, 0.0
  %450 = vadd.xlane.f32.xlu0 %v449
  %v451 = vpop.xlane.xlu0 %450
  %v452 = vsel %vm400, %v436, 0.0
  %453 = vadd.xlane.f32.xlu0 %v452
  %v454 = vpop.xlane.xlu0 %453
  %v455 = vsel %vm400, %v438, 0.0
  %456 = vadd.xlane.f32.xlu0 %v455
  %v457 = vpop.xlane.xlu0 %456
  %v458 = vsel %vm400, %v440, 0.0
  %459 = vadd.xlane.f32.xlu0 %v458
  %v460 = vpop.xlane.xlu0 %459
  %v461 = vsel %vm400, %v442, 0.0
  %462 = vadd.xlane.f32.xlu0 %v461
  %v463 = vpop.xlane.xlu0 %462
  %v464 = vsel %vm400, %v444, 0.0
  %465 = vadd.xlane.f32.xlu0 %v464
  %v466 = vpop.xlane.xlu0 %465
  %v467 = vsel %vm400, %v446, 0.0
  %468 = vadd.xlane.f32.xlu0 %v467
  %v469 = vpop.xlane.xlu0 %468
  %v470 = vsel %vm400, %v448, 0.0
  %471 = vadd.xlane.f32.xlu0 %v470
  %v472 = vpop.xlane.xlu0 %471
  %v473 = vrcp.pop %v451
  %v474 = vrcp.pop %v454
  %v475 = vrcp.pop %v457
  %v476 = vrcp.pop %v460
  %v477 = vrcp.pop %v463
  %v478 = vrcp.pop %v466
  %v479 = vrcp.pop %v469
  %v480 = vrcp.pop %v472
  %v481 = vmul.f32 %v434, %v473
  %v482 = vmul.f32 %v436, %v474
  %v483 = vmul.f32 %v438, %v475
  %v484 = vmul.f32 %v440, %v476
  %v485 = vmul.f32 %v442, %v477
  %v486 = vmul.f32 %v444, %v478
  %v487 = vmul.f32 %v446, %v479
  %v488 = vmul.f32 %v448, %v480
  %v489 = vsub.f32 0.0, %v384
  %v490 = vsub.f32 0.0, %v385
  %v491 = vsub.f32 0.0, %v386
  %v492 = vsub.f32 0.0, %v387
  %v493 = vsub.f32 0.0, %v388
  %v494 = vsub.f32 0.0, %v389
  %v495 = vsub.f32 0.0, %v390
  %v496 = vsub.f32 0.0, %v391
  %v497 = vsel %vm85, %v489, -1e+12
  %v498 = vsel %vm86, %v490, -1e+12
  %v499 = vsel %vm87, %v491, -1e+12
  %v500 = vsel %vm88, %v492, -1e+12
  %v501 = vsel %vm89, %v493, -1e+12
  %v502 = vsel %vm90, %v494, -1e+12
  %v503 = vsel %vm91, %v495, -1e+12
  %v504 = vsel %vm92, %v496, -1e+12
  %v505 = vsel %vm400, %v497, -inf
  %506 = vmax.xlane.f32.xlu0 %v505
  %v507 = vpop.xlane.xlu0 %506
  %v508 = vsel %vm400, %v498, -inf
  %509 = vmax.xlane.f32.xlu0 %v508
  %v510 = vpop.xlane.xlu0 %509
  %v511 = vsel %vm400, %v499, -inf
  %512 = vmax.xlane.f32.xlu0 %v511
  %v513 = vpop.xlane.xlu0 %512
  %v514 = vsel %vm400, %v500, -inf
  %515 = vmax.xlane.f32.xlu0 %v514
  %v516 = vpop.xlane.xlu0 %515
  %v517 = vsel %vm400, %v501, -inf
  %518 = vmax.xlane.f32.xlu0 %v517
  %v519 = vpop.xlane.xlu0 %518
  %v520 = vsel %vm400, %v502, -inf
  %521 = vmax.xlane.f32.xlu0 %v520
  %v522 = vpop.xlane.xlu0 %521
  %v523 = vsel %vm400, %v503, -inf
  %524 = vmax.xlane.f32.xlu0 %v523
  %v525 = vpop.xlane.xlu0 %524
  %v526 = vsel %vm400, %v504, -inf
  %527 = vmax.xlane.f32.xlu0 %v526
  %v528 = vpop.xlane.xlu0 %527
  %v529 = vsub.f32 %v497, %v507
  %v530 = vsub.f32 %v498, %v510
  %v531 = vsub.f32 %v499, %v513
  %v532 = vsub.f32 %v500, %v516
  %v533 = vsub.f32 %v501, %v519
  %v534 = vsub.f32 %v502, %v522
  %v535 = vsub.f32 %v503, %v525
  %v536 = vsub.f32 %v504, %v528
  %v537 = vmul.f32 %v529, 1.442695
  %v538 = vpow.pop %v537
  %v539 = vmul.f32 %v530, 1.442695
  %v540 = vpow.pop %v539
  %v541 = vmul.f32 %v531, 1.442695
  %v542 = vpow.pop %v541
  %v543 = vmul.f32 %v532, 1.442695
  %v544 = vpow.pop %v543
  %v545 = vmul.f32 %v533, 1.442695
  %v546 = vpow.pop %v545
  %v547 = vmul.f32 %v534, 1.442695
  %v548 = vpow.pop %v547
  %v549 = vmul.f32 %v535, 1.442695
  %v550 = vpow.pop %v549
  %v551 = vmul.f32 %v536, 1.442695
  %v552 = vpow.pop %v551
  %v553 = vsel %vm400, %v538, 0.0
  %554 = vadd.xlane.f32.xlu0 %v553
  %v555 = vpop.xlane.xlu0 %554
  %v556 = vsel %vm400, %v540, 0.0
  %557 = vadd.xlane.f32.xlu0 %v556
  %v558 = vpop.xlane.xlu0 %557
  %v559 = vsel %vm400, %v542, 0.0
  %560 = vadd.xlane.f32.xlu0 %v559
  %v561 = vpop.xlane.xlu0 %560
  %v562 = vsel %vm400, %v544, 0.0
  %563 = vadd.xlane.f32.xlu0 %v562
  %v564 = vpop.xlane.xlu0 %563
  %v565 = vsel %vm400, %v546, 0.0
  %566 = vadd.xlane.f32.xlu0 %v565
  %v567 = vpop.xlane.xlu0 %566
  %v568 = vsel %vm400, %v548, 0.0
  %569 = vadd.xlane.f32.xlu0 %v568
  %v570 = vpop.xlane.xlu0 %569
  %v571 = vsel %vm400, %v550, 0.0
  %572 = vadd.xlane.f32.xlu0 %v571
  %v573 = vpop.xlane.xlu0 %572
  %v574 = vsel %vm400, %v552, 0.0
  %575 = vadd.xlane.f32.xlu0 %v574
  %v576 = vpop.xlane.xlu0 %575
  %v577 = vrcp.pop %v555
  %v578 = vrcp.pop %v558
  %v579 = vrcp.pop %v561
  %v580 = vrcp.pop %v564
  %v581 = vrcp.pop %v567
  %v582 = vrcp.pop %v570
  %v583 = vrcp.pop %v573
  %v584 = vrcp.pop %v576
  %v585 = vmul.f32 %v538, %v577
  %v586 = vmul.f32 %v540, %v578
  %v587 = vmul.f32 %v542, %v579
  %v588 = vmul.f32 %v544, %v580
  %v589 = vmul.f32 %v546, %v581
  %v590 = vmul.f32 %v548, %v582
  %v591 = vmul.f32 %v550, %v583
  %v592 = vmul.f32 %v552, %v584
  %v593 = vsub.f32 0.0, %v585
  %v594 = vsub.f32 0.0, %v586
  %v595 = vsub.f32 0.0, %v587
  %v596 = vsub.f32 0.0, %v588
  %v597 = vsub.f32 0.0, %v589
  %v598 = vsub.f32 0.0, %v590
  %v599 = vsub.f32 0.0, %v591
  %v600 = vsub.f32 0.0, %v592
  %v601 = vpack.c.bf16 %v482, %v481
  %v602 = vpack.c.bf16 %v484, %v483
  %v603 = vpack.c.bf16 %v486, %v485
  %v604 = vpack.c.bf16 %v488, %v487
  %v605 = vpack.c.bf16 %v594, %v593
  %v606 = vpack.c.bf16 %v596, %v595
  %v607 = vpack.c.bf16 %v598, %v597
  %v608 = vpack.c.bf16 %v600, %v599
  %v610 = vsel %vm400, %v601, 0
  %v613 = vsel %vm400, %v602, 0
  %v616 = vsel %vm400, %v603, 0
  %v619 = vsel %vm400, %v604, 0
  %v622 = vsel %vm400, %v605, 0
  %v625 = vsel %vm400, %v606, 0
  %v628 = vsel %vm400, %v607, 0
  %v631 = vsel %vm400, %v608, 0
  %633 = vmatprep.subr.bf16.mxu0 0
  %634 = vmatpush1.bf16.msra.mxu0 %v133
  %635 = vmatprep.subr.bf16.mxu0 0
  %636 = vmatpush1.bf16.msra.mxu0 %v134
  %637 = vmatprep.subr.bf16.mxu0 0
  %638 = vmatpush1.bf16.msra.mxu0 %v135
  %639 = vmatprep.subr.bf16.mxu0 0
  %640 = vmatpush1.bf16.msra.mxu0 %v136
  %641 = vmatprep.subr.bf16.mxu0 0
  %642 = vmatpush1.bf16.msra.mxu0 0
  %643 = vmatprep.subr.bf16.mxu0 0
  %644 = vmatpush1.bf16.msra.mxu0 0
  %645 = vmatprep.subr.bf16.mxu0 0
  %646 = vmatpush1.bf16.msra.mxu0 0
  %647 = vmatprep.subr.bf16.mxu0 0
  %648 = vmatpush1.bf16.msra.mxu0 0
  %649 = vmatprep.subr.bf16.mxu0 0
  %650 = vmatpush1.bf16.msra.mxu0 0
  %651 = vmatprep.subr.bf16.mxu0 0
  %652 = vmatpush1.bf16.msra.mxu0 0
  %653 = vmatprep.subr.bf16.mxu0 0
  %654 = vmatpush1.bf16.msra.mxu0 0
  %655 = vmatprep.subr.bf16.mxu0 0
  %656 = vmatpush1.bf16.msra.mxu0 0
  %657 = vmatprep.subr.bf16.mxu0 0
  %658 = vmatpush1.bf16.msra.mxu0 0
  %659 = vmatprep.subr.bf16.mxu0 0
  %660 = vmatpush1.bf16.msra.mxu0 0
  %661 = vmatprep.subr.bf16.mxu0 0
  %662 = vmatpush1.bf16.msra.mxu0 0
  %663 = vmatprep.subr.bf16.mxu0 0
  %664 = vmatpush1.bf16.msra.mxu0 0
  %665 = vmatprep.mubr.bf16.mxu0 0
  %666 = vmatmul.mubr.bf16.gmra.mrb[0].mxu0 %v610
  %v667 = vpop.f32.mrb[0].mxu0
  %v668 = vadd.f32 0.0, %v667
  %v669 = vpop.f32.mrb[0].mxu0
  %v670 = vpop.f32.mrb[0].mxu0
  %v671 = vadd.f32 0.0, %v670
  %v672 = vpop.f32.mrb[0].mxu0
  %673 = vmatprep.mubr.bf16.mxu0 0
  %674 = vmatmul.mubr.bf16.gmra.mrb[0].mxu0 %v613
  %v675 = vpop.f32.mrb[0].mxu0
  %v676 = vadd.f32 0.0, %v675
  %v677 = vpop.f32.mrb[0].mxu0
  %v678 = vpop.f32.mrb[0].mxu0
  %v679 = vadd.f32 0.0, %v678
  %v680 = vpop.f32.mrb[0].mxu0
  %681 = vmatprep.mubr.bf16.mxu0 0
  %682 = vmatmul.mubr.bf16.gmra.mrb[0].mxu0 %v616
  %v683 = vpop.f32.mrb[0].mxu0
  %v684 = vadd.f32 0.0, %v683
  %v685 = vpop.f32.mrb[0].mxu0
  %v686 = vpop.f32.mrb[0].mxu0
  %v687 = vadd.f32 0.0, %v686
  %v688 = vpop.f32.mrb[0].mxu0
  %689 = vmatprep.mubr.bf16.mxu0 0
  %690 = vmatmul.mubr.bf16.gmra.mrb[0].mxu0 %v619
  %v691 = vpop.f32.mrb[0].mxu0
  %v692 = vadd.f32 0.0, %v691
  %v693 = vpop.f32.mrb[0].mxu0
  %v694 = vpop.f32.mrb[0].mxu0
  %v695 = vadd.f32 0.0, %v694
  %v696 = vpop.f32.mrb[0].mxu0
  %697 = vmatprep.mubr.bf16.mxu0 0
  %698 = vmatmul.mubr.bf16.gmra.mrb[0].mxu0 %v622
  %v699 = vpop.f32.mrb[0].mxu0
  %v700 = vadd.f32 0.0, %v699
  %v701 = vpop.f32.mrb[0].mxu0
  %v702 = vpop.f32.mrb[0].mxu0
  %v703 = vadd.f32 0.0, %v702
  %v704 = vpop.f32.mrb[0].mxu0
  %705 = vmatprep.mubr.bf16.mxu0 0
  %706 = vmatmul.mubr.bf16.gmra.mrb[0].mxu0 %v625
  %v707 = vpop.f32.mrb[0].mxu0
  %v708 = vadd.f32 0.0, %v707
  %v709 = vpop.f32.mrb[0].mxu0
  %v710 = vpop.f32.mrb[0].mxu0
  %v711 = vadd.f32 0.0, %v710
  %v712 = vpop.f32.mrb[0].mxu0
  %713 = vmatprep.mubr.bf16.mxu0 0
  %714 = vmatmul.mubr.bf16.gmra.mrb[0].mxu0 %v628
  %v715 = vpop.f32.mrb[0].mxu0
  %v716 = vadd.f32 0.0, %v715
  %v717 = vpop.f32.mrb[0].mxu0
  %v718 = vpop.f32.mrb[0].mxu0
  %v719 = vadd.f32 0.0, %v718
  %v720 = vpop.f32.mrb[0].mxu0
  %721 = vmatprep.mubr.bf16.mxu0 0
  %722 = vmatmul.mubr.bf16.gmra.mrb[0].mxu0 %v631
  %v723 = vpop.f32.mrb[0].mxu0
  %v724 = vadd.f32 0.0, %v723
  %v725 = vpop.f32.mrb[0].mxu0
  %v726 = vpop.f32.mrb[0].mxu0
  %v727 = vadd.f32 0.0, %v726
  %v728 = vpop.f32.mrb[0].mxu0
  %729 = vdwg.mxu0
  %v730 = vpack.c.bf16 %v671, %v668
  %v731 = vpack.c.bf16 %v679, %v676
  %v732 = vpack.c.bf16 %v687, %v684
  %v733 = vpack.c.bf16 %v695, %v692
  %v734 = vld [vmem:[%s6] sm:$0xf]
  %v735 = vld [vmem:[%s6 + $0x4] sm:$0xf]
  %v736 = vld [vmem:[%s6 + $0x8] sm:$0xf]
  %v737 = vld [vmem:[%s6 + $0xc] sm:$0xf]
  %v738 = vld [vmem:[%s6 + $0x10] sm:$0xf]
  %v739 = vld [vmem:[%s6 + $0x14] sm:$0xf]
  %v740 = vld [vmem:[%s6 + $0x18] sm:$0xf]
  %v741 = vld [vmem:[%s6 + $0x1c] sm:$0xf]
  %v742 = vld [vmem:[%s6 + $0x20] sm:$0xf]
  %v743 = vld [vmem:[%s6 + $0x24] sm:$0xf]
  %v744 = vld [vmem:[%s6 + $0x28] sm:$0xf]
  %v745 = vld [vmem:[%s6 + $0x2c] sm:$0xf]
  %v746 = vld [vmem:[%s6 + $0x30] sm:$0xf]
  %v747 = vld [vmem:[%s6 + $0x34] sm:$0xf]
  %v748 = vld [vmem:[%s6 + $0x38] sm:$0xf]
  %v749 = vld [vmem:[%s6 + $0x3c] sm:$0xf]
  %v750 = vpack.c.bf16 %v703, %v700
  %v751 = vpack.c.bf16 %v711, %v708
  %v752 = vpack.c.bf16 %v719, %v716
  %v753 = vpack.c.bf16 %v727, %v724
  %v754 = vld [vmem:[%s7] sm:$0xf]
  %v755 = vld [vmem:[%s7 + $0x4] sm:$0xf]
  %v756 = vld [vmem:[%s7 + $0x8] sm:$0xf]
  %v757 = vld [vmem:[%s7 + $0xc] sm:$0xf]
  %v758 = vld [vmem:[%s7 + $0x10] sm:$0xf]
  %v759 = vld [vmem:[%s7 + $0x14] sm:$0xf]
  %v760 = vld [vmem:[%s7 + $0x18] sm:$0xf]
  %v761 = vld [vmem:[%s7 + $0x1c] sm:$0xf]
  %v762 = vld [vmem:[%s7 + $0x20] sm:$0xf]
  %v763 = vld [vmem:[%s7 + $0x24] sm:$0xf]
  %v764 = vld [vmem:[%s7 + $0x28] sm:$0xf]
  %v765 = vld [vmem:[%s7 + $0x2c] sm:$0xf]
  %v766 = vld [vmem:[%s7 + $0x30] sm:$0xf]
  %v767 = vld [vmem:[%s7 + $0x34] sm:$0xf]
  %v768 = vld [vmem:[%s7 + $0x38] sm:$0xf]
  %v769 = vld [vmem:[%s7 + $0x3c] sm:$0xf]
  %v786 = vunpack.c.l.b16 %v754
  %v787 = vunpack.c.l.b16 %v755
  %v788 = vunpack.c.l.b16 %v756
  %v789 = vunpack.c.l.b16 %v757
  %v790 = vunpack.c.l.b16 %v758
  %v791 = vunpack.c.l.b16 %v759
  %v792 = vunpack.c.l.b16 %v760
  %v793 = vunpack.c.l.b16 %v761
  %v794 = vunpack.c.l.b16 %v762
  %v795 = vunpack.c.l.b16 %v763
  %v796 = vunpack.c.l.b16 %v764
  %v797 = vunpack.c.l.b16 %v765
  %v798 = vunpack.c.l.b16 %v766
  %v799 = vunpack.c.l.b16 %v767
  %v800 = vunpack.c.l.b16 %v768
  %v801 = vunpack.c.l.b16 %v769
  %v802 = vpack.c.b16 %v787, %v786
  %v803 = vpack.c.b16 %v789, %v788
  %v804 = vpack.c.b16 %v791, %v790
  %v805 = vpack.c.b16 %v793, %v792
  %v806 = vpack.c.b16 %v795, %v794
  %v807 = vpack.c.b16 %v797, %v796
  %v808 = vpack.c.b16 %v799, %v798
  %v809 = vpack.c.b16 %v801, %v800
  %818 = vmatprep.subr.bf16.mxu0 0
  %819 = vmatpush1.bf16.msra.mxu0 %v802
  %820 = vmatprep.subr.bf16.mxu0 0
  %821 = vmatpush1.bf16.msra.mxu0 %v803
  %822 = vmatprep.subr.bf16.mxu0 0
  %823 = vmatpush1.bf16.msra.mxu0 %v804
  %824 = vmatprep.subr.bf16.mxu0 0
  %825 = vmatpush1.bf16.msra.mxu0 %v805
  %826 = vmatprep.subr.bf16.mxu0 0
  %827 = vmatpush1.bf16.msra.mxu0 %v806
  %828 = vmatprep.subr.bf16.mxu0 0
  %829 = vmatpush1.bf16.msra.mxu0 %v807
  %830 = vmatprep.subr.bf16.mxu0 0
  %831 = vmatpush1.bf16.msra.mxu0 %v808
  %832 = vmatprep.subr.bf16.mxu0 0
  %833 = vmatpush1.bf16.msra.mxu0 %v809
  %834 = vmatprep.subr.bf16.mxu0 0
  %835 = vmatpush1.bf16.msra.mxu0 0
  %836 = vmatprep.subr.bf16.mxu0 0
  %837 = vmatpush1.bf16.msra.mxu0 0
  %838 = vmatprep.subr.bf16.mxu0 0
  %839 = vmatpush1.bf16.msra.mxu0 0
  %840 = vmatprep.subr.bf16.mxu0 0
  %841 = vmatpush1.bf16.msra.mxu0 0
  %842 = vmatprep.subr.bf16.mxu0 0
  %843 = vmatpush1.bf16.msra.mxu0 0
  %844 = vmatprep.subr.bf16.mxu0 0
  %845 = vmatpush1.bf16.msra.mxu0 0
  %846 = vmatprep.subr.bf16.mxu0 0
  %847 = vmatpush1.bf16.msra.mxu0 0
  %848 = vmatprep.subr.bf16.mxu0 0
  %849 = vmatpush1.bf16.msra.mxu0 0
  %850 = vmatprep.mubr.bf16.mxu0 0
  %851 = vmatmul.mubr.bf16.gmra.mrb[0].mxu0 %v750
  %v852 = vpop.f32.mrb[0].mxu0
  %v853 = vadd.f32 0.0, %v852
  %v854 = vpop.f32.mrb[0].mxu0
  %v855 = vpop.f32.mrb[0].mxu0
  %v856 = vadd.f32 0.0, %v855
  %v857 = vpop.f32.mrb[0].mxu0
  %858 = vmatprep.mubr.bf16.mxu0 0
  %859 = vmatmul.mubr.bf16.gmra.mrb[0].mxu0 %v751
  %v860 = vpop.f32.mrb[0].mxu0
  %v861 = vadd.f32 0.0, %v860
  %v862 = vpop.f32.mrb[0].mxu0
  %v863 = vpop.f32.mrb[0].mxu0
  %v864 = vadd.f32 0.0, %v863
  %v865 = vpop.f32.mrb[0].mxu0
  %866 = vmatprep.mubr.bf16.mxu0 0
  %867 = vmatmul.mubr.bf16.gmra.mrb[0].mxu0 %v752
  %v868 = vpop.f32.mrb[0].mxu0
  %v869 = vadd.f32 0.0, %v868
  %v870 = vpop.f32.mrb[0].mxu0
  %v871 = vpop.f32.mrb[0].mxu0
  %v872 = vadd.f32 0.0, %v871
  %v873 = vpop.f32.mrb[0].mxu0
  %874 = vmatprep.mubr.bf16.mxu0 0
  %875 = vmatmul.mubr.bf16.gmra.mrb[0].mxu0 %v753
  %v876 = vpop.f32.mrb[0].mxu0
  %v877 = vadd.f32 0.0, %v876
  %v878 = vpop.f32.mrb[0].mxu0
  %v879 = vpop.f32.mrb[0].mxu0
  %v880 = vadd.f32 0.0, %v879
  %v881 = vpop.f32.mrb[0].mxu0
  %882 = vdwg.mxu0
  %v899 = vunpack.c.l.b16 %v734
  %v900 = vunpack.c.l.b16 %v735
  %v901 = vunpack.c.l.b16 %v736
  %v902 = vunpack.c.l.b16 %v737
  %v903 = vunpack.c.l.b16 %v738
  %v904 = vunpack.c.l.b16 %v739
  %v905 = vunpack.c.l.b16 %v740
  %v906 = vunpack.c.l.b16 %v741
  %v907 = vunpack.c.l.b16 %v742
  %v908 = vunpack.c.l.b16 %v743
  %v909 = vunpack.c.l.b16 %v744
  %v910 = vunpack.c.l.b16 %v745
  %v911 = vunpack.c.l.b16 %v746
  %v912 = vunpack.c.l.b16 %v747
  %v913 = vunpack.c.l.b16 %v748
  %v914 = vunpack.c.l.b16 %v749
  %v915 = vpack.c.b16 %v900, %v899
  %v916 = vpack.c.b16 %v902, %v901
  %v917 = vpack.c.b16 %v904, %v903
  %v918 = vpack.c.b16 %v906, %v905
  %v919 = vpack.c.b16 %v908, %v907
  %v920 = vpack.c.b16 %v910, %v909
  %v921 = vpack.c.b16 %v912, %v911
  %v922 = vpack.c.b16 %v914, %v913
  %931 = vmatprep.subr.bf16.mxu0 0
  %932 = vmatpush1.bf16.msra.mxu0 %v915
  %933 = vmatprep.subr.bf16.mxu0 0
  %934 = vmatpush1.bf16.msra.mxu0 %v916
  %935 = vmatprep.subr.bf16.mxu0 0
  %936 = vmatpush1.bf16.msra.mxu0 %v917
  %937 = vmatprep.subr.bf16.mxu0 0
  %938 = vmatpush1.bf16.msra.mxu0 %v918
  %939 = vmatprep.subr.bf16.mxu0 0
  %940 = vmatpush1.bf16.msra.mxu0 %v919
  %941 = vmatprep.subr.bf16.mxu0 0
  %942 = vmatpush1.bf16.msra.mxu0 %v920
  %943 = vmatprep.subr.bf16.mxu0 0
  %944 = vmatpush1.bf16.msra.mxu0 %v921
  %945 = vmatprep.subr.bf16.mxu0 0
  %946 = vmatpush1.bf16.msra.mxu0 %v922
  %947 = vmatprep.subr.bf16.mxu0 0
  %948 = vmatpush1.bf16.msra.mxu0 0
  %949 = vmatprep.subr.bf16.mxu0 0
  %950 = vmatpush1.bf16.msra.mxu0 0
  %951 = vmatprep.subr.bf16.mxu0 0
  %952 = vmatpush1.bf16.msra.mxu0 0
  %953 = vmatprep.subr.bf16.mxu0 0
  %954 = vmatpush1.bf16.msra.mxu0 0
  %955 = vmatprep.subr.bf16.mxu0 0
  %956 = vmatpush1.bf16.msra.mxu0 0
  %957 = vmatprep.subr.bf16.mxu0 0
  %958 = vmatpush1.bf16.msra.mxu0 0
  %959 = vmatprep.subr.bf16.mxu0 0
  %960 = vmatpush1.bf16.msra.mxu0 0
  %961 = vmatprep.subr.bf16.mxu0 0
  %962 = vmatpush1.bf16.msra.mxu0 0
  %963 = vmatprep.mubr.bf16.mxu0 0
  %964 = vmatmul.mubr.bf16.gmra.mrb[0].mxu0 %v730
  %v965 = vpop.f32.mrb[0].mxu0
  %v966 = vadd.f32 %v853, %v965
  %v967 = vpop.f32.mrb[0].mxu0
  %v968 = vpop.f32.mrb[0].mxu0
  %v969 = vadd.f32 %v856, %v968
  %v970 = vpop.f32.mrb[0].mxu0
  %971 = vmatprep.mubr.bf16.mxu0 0
  %972 = vmatmul.mubr.bf16.gmra.mrb[0].mxu0 %v731
  %v973 = vpop.f32.mrb[0].mxu0
  %v974 = vadd.f32 %v861, %v973
  %v975 = vpop.f32.mrb[0].mxu0
  %v976 = vpop.f32.mrb[0].mxu0
  %v977 = vadd.f32 %v864, %v976
  %v978 = vpop.f32.mrb[0].mxu0
  %979 = vmatprep.mubr.bf16.mxu0 0
  %980 = vmatmul.mubr.bf16.gmra.mrb[0].mxu0 %v732
  %v981 = vpop.f32.mrb[0].mxu0
  %v982 = vadd.f32 %v869, %v981
  %v983 = vpop.f32.mrb[0].mxu0
  %v984 = vpop.f32.mrb[0].mxu0
  %v985 = vadd.f32 %v872, %v984
  %v986 = vpop.f32.mrb[0].mxu0
  %987 = vmatprep.mubr.bf16.mxu0 0
  %988 = vmatmul.mubr.bf16.gmra.mrb[0].mxu0 %v733
  %v989 = vpop.f32.mrb[0].mxu0
  %v990 = vadd.f32 %v877, %v989
  %v991 = vpop.f32.mrb[0].mxu0
  %v992 = vpop.f32.mrb[0].mxu0
  %v993 = vadd.f32 %v880, %v992
  %v994 = vpop.f32.mrb[0].mxu0
  %995 = vdwg.mxu0
  %vm996 = vcmp.gt.f32.partialorder %v966, 0.0
  %vm997 = vcmp.gt.f32.partialorder %v969, 0.0
  %vm998 = vcmp.gt.f32.partialorder %v974, 0.0
  %vm999 = vcmp.gt.f32.partialorder %v977, 0.0
  %vm1000 = vcmp.gt.f32.partialorder %v982, 0.0
  %vm1001 = vcmp.gt.f32.partialorder %v985, 0.0
  %vm1002 = vcmp.gt.f32.partialorder %v990, 0.0
  %vm1003 = vcmp.gt.f32.partialorder %v993, 0.0
  %v1004 = vmin.f32 %v966, 0.0
  %v1005 = vmin.f32 %v969, 0.0
  %v1006 = vmin.f32 %v974, 0.0
  %v1007 = vmin.f32 %v977, 0.0
  %v1008 = vmin.f32 %v982, 0.0
  %v1009 = vmin.f32 %v985, 0.0
  %v1010 = vmin.f32 %v990, 0.0
  %v1011 = vmin.f32 %v993, 0.0
  %v1012 = vmul.f32 %v1004, 1.442695
  %v1013 = vpow.pop %v1012
  %v1014 = vmul.f32 %v1005, 1.442695
  %v1015 = vpow.pop %v1014
  %v1016 = vmul.f32 %v1006, 1.442695
  %v1017 = vpow.pop %v1016
  %v1018 = vmul.f32 %v1007, 1.442695
  %v1019 = vpow.pop %v1018
  %v1020 = vmul.f32 %v1008, 1.442695
  %v1021 = vpow.pop %v1020
  %v1022 = vmul.f32 %v1009, 1.442695
  %v1023 = vpow.pop %v1022
  %v1024 = vmul.f32 %v1010, 1.442695
  %v1025 = vpow.pop %v1024
  %v1026 = vmul.f32 %v1011, 1.442695
  %v1027 = vpow.pop %v1026
  %v1028 = vsub.f32 %v1013, 1.0
  %v1029 = vsub.f32 %v1015, 1.0
  %v1030 = vsub.f32 %v1017, 1.0
  %v1031 = vsub.f32 %v1019, 1.0
  %v1032 = vsub.f32 %v1021, 1.0
  %v1033 = vsub.f32 %v1023, 1.0
  %v1034 = vsub.f32 %v1025, 1.0
  %v1035 = vsub.f32 %v1027, 1.0
  %v1036 = vsel %vm996, %v966, %v1028
  %v1037 = vsel %vm997, %v969, %v1029
  %v1038 = vsel %vm998, %v974, %v1030
  %v1039 = vsel %vm999, %v977, %v1031
  %v1040 = vsel %vm1000, %v982, %v1032
  %v1041 = vsel %vm1001, %v985, %v1033
  %v1042 = vsel %vm1002, %v990, %v1034
  %v1043 = vsel %vm1003, %v993, %v1035
  %v1044 = vpack.c.bf16 %v1037, %v1036
  %v1045 = vpack.c.bf16 %v1039, %v1038
  %v1046 = vpack.c.bf16 %v1041, %v1040
  %v1047 = vpack.c.bf16 %v1043, %v1042
  %v1048 = vld [vmem:[%s8] sm:$0xf]
  %v1049 = vld [vmem:[%s8 + $0x4] sm:$0xf]
  %v1050 = vld [vmem:[%s8 + $0x8] sm:$0xf]
  %v1051 = vld [vmem:[%s8 + $0xc] sm:$0xf]
  %v1052 = vld [vmem:[%s8 + $0x10] sm:$0xf]
  %v1053 = vld [vmem:[%s8 + $0x14] sm:$0xf]
  %v1054 = vld [vmem:[%s8 + $0x18] sm:$0xf]
  %v1055 = vld [vmem:[%s8 + $0x1c] sm:$0xf]
  %v1056 = vld [vmem:[%s8 + $0x20] sm:$0xf]
  %v1057 = vld [vmem:[%s8 + $0x24] sm:$0xf]
  %v1058 = vld [vmem:[%s8 + $0x28] sm:$0xf]
  %v1059 = vld [vmem:[%s8 + $0x2c] sm:$0xf]
  %v1060 = vld [vmem:[%s8 + $0x30] sm:$0xf]
  %v1061 = vld [vmem:[%s8 + $0x34] sm:$0xf]
  %v1062 = vld [vmem:[%s8 + $0x38] sm:$0xf]
  %v1063 = vld [vmem:[%s8 + $0x3c] sm:$0xf]
  %v1080 = vunpack.c.l.b16 %v1048
  %v1081 = vunpack.c.l.b16 %v1049
  %v1082 = vunpack.c.l.b16 %v1050
  %v1083 = vunpack.c.l.b16 %v1051
  %v1084 = vunpack.c.l.b16 %v1052
  %v1085 = vunpack.c.l.b16 %v1053
  %v1086 = vunpack.c.l.b16 %v1054
  %v1087 = vunpack.c.l.b16 %v1055
  %v1088 = vunpack.c.l.b16 %v1056
  %v1089 = vunpack.c.l.b16 %v1057
  %v1090 = vunpack.c.l.b16 %v1058
  %v1091 = vunpack.c.l.b16 %v1059
  %v1092 = vunpack.c.l.b16 %v1060
  %v1093 = vunpack.c.l.b16 %v1061
  %v1094 = vunpack.c.l.b16 %v1062
  %v1095 = vunpack.c.l.b16 %v1063
  %v1096 = vpack.c.b16 %v1081, %v1080
  %v1097 = vpack.c.b16 %v1083, %v1082
  %v1098 = vpack.c.b16 %v1085, %v1084
  %v1099 = vpack.c.b16 %v1087, %v1086
  %v1100 = vpack.c.b16 %v1089, %v1088
  %v1101 = vpack.c.b16 %v1091, %v1090
  %v1102 = vpack.c.b16 %v1093, %v1092
  %v1103 = vpack.c.b16 %v1095, %v1094
  %1112 = vmatprep.subr.bf16.mxu0 0
  %1113 = vmatpush1.bf16.msra.mxu0 %v1096
  %1114 = vmatprep.subr.bf16.mxu0 0
  %1115 = vmatpush1.bf16.msra.mxu0 %v1097
  %1116 = vmatprep.subr.bf16.mxu0 0
  %1117 = vmatpush1.bf16.msra.mxu0 %v1098
  %1118 = vmatprep.subr.bf16.mxu0 0
  %1119 = vmatpush1.bf16.msra.mxu0 %v1099
  %1120 = vmatprep.subr.bf16.mxu0 0
  %1121 = vmatpush1.bf16.msra.mxu0 %v1100
  %1122 = vmatprep.subr.bf16.mxu0 0
  %1123 = vmatpush1.bf16.msra.mxu0 %v1101
  %1124 = vmatprep.subr.bf16.mxu0 0
  %1125 = vmatpush1.bf16.msra.mxu0 %v1102
  %1126 = vmatprep.subr.bf16.mxu0 0
  %1127 = vmatpush1.bf16.msra.mxu0 %v1103
  %1128 = vmatprep.subr.bf16.mxu0 0
  %1129 = vmatpush1.bf16.msra.mxu0 0
  %1130 = vmatprep.subr.bf16.mxu0 0
  %1131 = vmatpush1.bf16.msra.mxu0 0
  %1132 = vmatprep.subr.bf16.mxu0 0
  %1133 = vmatpush1.bf16.msra.mxu0 0
  %1134 = vmatprep.subr.bf16.mxu0 0
  %1135 = vmatpush1.bf16.msra.mxu0 0
  %1136 = vmatprep.subr.bf16.mxu0 0
  %1137 = vmatpush1.bf16.msra.mxu0 0
  %1138 = vmatprep.subr.bf16.mxu0 0
  %1139 = vmatpush1.bf16.msra.mxu0 0
  %1140 = vmatprep.subr.bf16.mxu0 0
  %1141 = vmatpush1.bf16.msra.mxu0 0
  %1142 = vmatprep.subr.bf16.mxu0 0
  %1143 = vmatpush1.bf16.msra.mxu0 0
  %1144 = vmatprep.mubr.bf16.mxu0 0
  %1145 = vmatmul.mubr.bf16.gmra.mrb[0].mxu0 %v1044
  %v1146 = vpop.f32.mrb[0].mxu0
  %v1147 = vadd.f32 0.0, %v1146
  %v1148 = vpop.f32.mrb[0].mxu0
  %v1149 = vpop.f32.mrb[0].mxu0
  %v1150 = vadd.f32 0.0, %v1149
  %v1151 = vpop.f32.mrb[0].mxu0
  %1152 = vmatprep.mubr.bf16.mxu0 0
  %1153 = vmatmul.mubr.bf16.gmra.mrb[0].mxu0 %v1045
  %v1154 = vpop.f32.mrb[0].mxu0
  %v1155 = vadd.f32 0.0, %v1154
  %v1156 = vpop.f32.mrb[0].mxu0
  %v1157 = vpop.f32.mrb[0].mxu0
  %v1158 = vadd.f32 0.0, %v1157
  %v1159 = vpop.f32.mrb[0].mxu0
  %1160 = vmatprep.mubr.bf16.mxu0 0
  %1161 = vmatmul.mubr.bf16.gmra.mrb[0].mxu0 %v1046
  %v1162 = vpop.f32.mrb[0].mxu0
  %v1163 = vadd.f32 0.0, %v1162
  %v1164 = vpop.f32.mrb[0].mxu0
  %v1165 = vpop.f32.mrb[0].mxu0
  %v1166 = vadd.f32 0.0, %v1165
  %v1167 = vpop.f32.mrb[0].mxu0
  %1168 = vmatprep.mubr.bf16.mxu0 0
  %1169 = vmatmul.mubr.bf16.gmra.mrb[0].mxu0 %v1047
  %v1170 = vpop.f32.mrb[0].mxu0
  %v1171 = vadd.f32 0.0, %v1170
  %v1172 = vpop.f32.mrb[0].mxu0
  %v1173 = vpop.f32.mrb[0].mxu0
  %v1174 = vadd.f32 0.0, %v1173
  %v1175 = vpop.f32.mrb[0].mxu0
  %1176 = vdwg.mxu0
  %v1177 = vld [vmem:[%s9] sm:$0x1]
  %v1179 = vlaneseq
  %v1180 = vshrl.u32 %v1179, 7
  %v1181 = vsub.s32 0, %v1180
  %v1182 = vrot.slane %v1177, %v1181
  %v1184 = vmul.f32 %v1147, %v1182
  %v1185 = vmul.f32 %v1150, %v1182
  %v1186 = vmul.f32 %v1155, %v1182
  %v1187 = vmul.f32 %v1158, %v1182
  %v1188 = vmul.f32 %v1163, %v1182
  %v1189 = vmul.f32 %v1166, %v1182
  %v1190 = vmul.f32 %v1171, %v1182
  %v1191 = vmul.f32 %v1174, %v1182
  %1192 = vadd.xlane.f32.xlu0 %v1184
  %v1193 = vpop.xlane.xlu0 %1192
  %1194 = vadd.xlane.f32.xlu0 %v1185
  %v1195 = vpop.xlane.xlu0 %1194
  %1196 = vadd.xlane.f32.xlu0 %v1186
  %v1197 = vpop.xlane.xlu0 %1196
  %1198 = vadd.xlane.f32.xlu0 %v1187
  %v1199 = vpop.xlane.xlu0 %1198
  %1200 = vadd.xlane.f32.xlu0 %v1188
  %v1201 = vpop.xlane.xlu0 %1200
  %1202 = vadd.xlane.f32.xlu0 %v1189
  %v1203 = vpop.xlane.xlu0 %1202
  %1204 = vadd.xlane.f32.xlu0 %v1190
  %v1205 = vpop.xlane.xlu0 %1204
  %1206 = vadd.xlane.f32.xlu0 %v1191
  %v1207 = vpop.xlane.xlu0 %1206
  %v1208 = vld [vmem:[%s10] sm:$0x1]
  %1209 = vmatprep.subr.mxu0 0.0
  %1210 = vmatpush1.xpose.msra.mxu0 %v1147
  %1211 = vmatprep.subr.mxu0 0.0
  %1212 = vmatpush1.xpose.msra.mxu0 %v1150
  %1213 = vmatprep.subr.mxu0 0.0
  %1214 = vmatpush1.xpose.msra.mxu0 %v1155
  %1215 = vmatprep.subr.mxu0 0.0
  %1216 = vmatpush1.xpose.msra.mxu0 %v1158
  %1217 = vmatprep.subr.mxu0 0.0
  %1218 = vmatpush1.xpose.msra.mxu0 %v1163
  %1219 = vmatprep.subr.mxu0 0.0
  %1220 = vmatpush1.xpose.msra.mxu0 %v1166
  %1221 = vmatprep.subr.mxu0 0.0
  %1222 = vmatpush1.xpose.msra.mxu0 %v1171
  %1223 = vmatprep.subr.mxu0 0.0
  %1224 = vmatpush1.xpose.msra.mxu0 %v1174
  %1225 = vmatprep.subr.mxu0 0.0
  %1226 = vmatpush1.xpose.msra.mxu0 0.0
  %1227 = vmatprep.subr.mxu0 0.0
  %1228 = vmatpush1.xpose.msra.mxu0 0.0
  %1229 = vmatprep.subr.mxu0 0.0
  %1230 = vmatpush1.xpose.msra.mxu0 0.0
  %1231 = vmatprep.subr.mxu0 0.0
  %1232 = vmatpush1.xpose.msra.mxu0 0.0
  %1233 = vmatprep.subr.mxu0 0.0
  %1234 = vmatpush1.xpose.msra.mxu0 0.0
  %1235 = vmatprep.subr.mxu0 0.0
  %1236 = vmatpush1.xpose.msra.mxu0 0.0
  %1237 = vmatprep.subr.mxu0 0.0
  %1238 = vmatpush1.xpose.msra.mxu0 0.0
  %1239 = vmatprep.subr.mxu0 0.0
  %1240 = vmatpush1.xpose.msra.mxu0 0.0
  %1241 = vmatprep.subr.mxu0 0.0
  %1242 = vmatpush1.xpose.msra.mxu0 0.0
  %1243 = vmatprep.subr.mxu0 0.0
  %1244 = vmatpush1.xpose.msra.mxu0 0.0
  %1245 = vmatprep.subr.mxu0 0.0
  %1246 = vmatpush1.xpose.msra.mxu0 0.0
  %1247 = vmatprep.subr.mxu0 0.0
  %1248 = vmatpush1.xpose.msra.mxu0 0.0
  %1249 = vmatprep.subr.mxu0 0.0
  %1250 = vmatpush1.xpose.msra.mxu0 0.0
  %1251 = vmatprep.subr.mxu0 0.0
  %1252 = vmatpush1.xpose.msra.mxu0 0.0
  %1253 = vmatprep.subr.mxu0 0.0
  %1254 = vmatpush1.xpose.msra.mxu0 0.0
  %1255 = vmatprep.subr.mxu0 0.0
  %1256 = vmatpush1.xpose.msra.mxu0 0.0
  %1257 = vmatprep.subr.mxu0 0.0
  %1258 = vmatpush1.xpose.msra.mxu0 0.0
  %1259 = vmatprep.subr.mxu0 0.0
  %1260 = vmatpush1.xpose.msra.mxu0 0.0
  %1261 = vmatprep.subr.mxu0 0.0
  %1262 = vmatpush1.xpose.msra.mxu0 0.0
  %1263 = vmatprep.subr.mxu0 0.0
  %1264 = vmatpush1.xpose.msra.mxu0 0.0
  %1265 = vmatprep.subr.mxu0 0.0
  %1266 = vmatpush1.xpose.msra.mxu0 0.0
  %1267 = vmatprep.subr.mxu0 0.0
  %1268 = vmatpush1.xpose.msra.mxu0 0.0
  %1269 = vmatprep.subr.mxu0 0.0
  %1270 = vmatpush1.xpose.msra.mxu0 0.0
  %1271 = vmatprep.subr.mxu0 0.0
  %1272 = vmatpush1.xpose.msra.mxu0 0.0
  %1273 = vmatprep.mubr.f32.mxu0 0.0
  %1274 = vmatmul.mubr.f32.gmra.mrb[0].mxu0 %v1208
  %v1275 = vpop.f32.mrb[0].mxu0
  %v1276 = vadd.f32 0.0, %v1275
  %v1277 = vpop.f32.mrb[0].mxu0
  %1278 = vdwg.mxu0
  %v1279 = vlaneseq
  %v1280 = vshrl.u32 %v1279, 7
  %v1281 = vsub.s32 0, %v1280
  %v1282 = vrot.slane %v1276, %v1281
  %v1283 = vadd.f32 %v1193, %v1282
  %v1284 = vadd.f32 %v1195, %v1282
  %v1285 = vadd.f32 %v1197, %v1282
  %v1286 = vadd.f32 %v1199, %v1282
  %v1287 = vadd.f32 %v1201, %v1282
  %v1288 = vadd.f32 %v1203, %v1282
  %v1289 = vadd.f32 %v1205, %v1282
  %v1290 = vadd.f32 %v1207, %v1282
  %vm1291 = vcmp.gt.f32.partialorder %v1283, 0.0
  %vm1292 = vcmp.gt.f32.partialorder %v1284, 0.0
  %vm1293 = vcmp.gt.f32.partialorder %v1285, 0.0
  %vm1294 = vcmp.gt.f32.partialorder %v1286, 0.0
  %vm1295 = vcmp.gt.f32.partialorder %v1287, 0.0
  %vm1296 = vcmp.gt.f32.partialorder %v1288, 0.0
  %vm1297 = vcmp.gt.f32.partialorder %v1289, 0.0
  %vm1298 = vcmp.gt.f32.partialorder %v1290, 0.0
  %v1299 = vmul.f32 %v1283, 0.3
  %v1300 = vmul.f32 %v1284, 0.3
  %v1301 = vmul.f32 %v1285, 0.3
  %v1302 = vmul.f32 %v1286, 0.3
  %v1303 = vmul.f32 %v1287, 0.3
  %v1304 = vmul.f32 %v1288, 0.3
  %v1305 = vmul.f32 %v1289, 0.3
  %v1306 = vmul.f32 %v1290, 0.3
  %v1307 = vsel %vm1291, %v1283, %v1299
  %v1308 = vsel %vm1292, %v1284, %v1300
  %v1309 = vsel %vm1293, %v1285, %v1301
  %v1310 = vsel %vm1294, %v1286, %v1302
  %v1311 = vsel %vm1295, %v1287, %v1303
  %v1312 = vsel %vm1296, %v1288, %v1304
  %v1313 = vsel %vm1297, %v1289, %v1305
  %v1314 = vsel %vm1298, %v1290, %v1306
  %v1315 = vsel %vm85, %v1307, -1e+12
  %v1316 = vsel %vm86, %v1308, -1e+12
  %v1317 = vsel %vm87, %v1309, -1e+12
  %v1318 = vsel %vm88, %v1310, -1e+12
  %v1319 = vsel %vm89, %v1311, -1e+12
  %v1320 = vsel %vm90, %v1312, -1e+12
  %v1321 = vsel %vm91, %v1313, -1e+12
  %v1322 = vsel %vm92, %v1314, -1e+12
  %v1323 = vsel %vm400, %v1315, -inf
  %1324 = vmax.xlane.f32.xlu0 %v1323
  %v1325 = vpop.xlane.xlu0 %1324
  %v1326 = vsel %vm400, %v1316, -inf
  %1327 = vmax.xlane.f32.xlu0 %v1326
  %v1328 = vpop.xlane.xlu0 %1327
  %v1329 = vsel %vm400, %v1317, -inf
  %1330 = vmax.xlane.f32.xlu0 %v1329
  %v1331 = vpop.xlane.xlu0 %1330
  %v1332 = vsel %vm400, %v1318, -inf
  %1333 = vmax.xlane.f32.xlu0 %v1332
  %v1334 = vpop.xlane.xlu0 %1333
  %v1335 = vsel %vm400, %v1319, -inf
  %1336 = vmax.xlane.f32.xlu0 %v1335
  %v1337 = vpop.xlane.xlu0 %1336
  %v1338 = vsel %vm400, %v1320, -inf
  %1339 = vmax.xlane.f32.xlu0 %v1338
  %v1340 = vpop.xlane.xlu0 %1339
  %v1341 = vsel %vm400, %v1321, -inf
  %1342 = vmax.xlane.f32.xlu0 %v1341
  %v1343 = vpop.xlane.xlu0 %1342
  %v1344 = vsel %vm400, %v1322, -inf
  %1345 = vmax.xlane.f32.xlu0 %v1344
  %v1346 = vpop.xlane.xlu0 %1345
  %v1347 = vsub.f32 %v1315, %v1325
  %v1348 = vsub.f32 %v1316, %v1328
  %v1349 = vsub.f32 %v1317, %v1331
  %v1350 = vsub.f32 %v1318, %v1334
  %v1351 = vsub.f32 %v1319, %v1337
  %v1352 = vsub.f32 %v1320, %v1340
  %v1353 = vsub.f32 %v1321, %v1343
  %v1354 = vsub.f32 %v1322, %v1346
  %v1355 = vmul.f32 %v1347, 1.442695
  %v1356 = vpow.pop %v1355
  %v1357 = vmul.f32 %v1348, 1.442695
  %v1358 = vpow.pop %v1357
  %v1359 = vmul.f32 %v1349, 1.442695
  %v1360 = vpow.pop %v1359
  %v1361 = vmul.f32 %v1350, 1.442695
  %v1362 = vpow.pop %v1361
  %v1363 = vmul.f32 %v1351, 1.442695
  %v1364 = vpow.pop %v1363
  %v1365 = vmul.f32 %v1352, 1.442695
  %v1366 = vpow.pop %v1365
  %v1367 = vmul.f32 %v1353, 1.442695
  %v1368 = vpow.pop %v1367
  %v1369 = vmul.f32 %v1354, 1.442695
  %v1370 = vpow.pop %v1369
  %v1371 = vsel %vm400, %v1356, 0.0
  %1372 = vadd.xlane.f32.xlu0 %v1371
  %v1373 = vpop.xlane.xlu0 %1372
  %v1374 = vsel %vm400, %v1358, 0.0
  %1375 = vadd.xlane.f32.xlu0 %v1374
  %v1376 = vpop.xlane.xlu0 %1375
  %v1377 = vsel %vm400, %v1360, 0.0
  %1378 = vadd.xlane.f32.xlu0 %v1377
  %v1379 = vpop.xlane.xlu0 %1378
  %v1380 = vsel %vm400, %v1362, 0.0
  %1381 = vadd.xlane.f32.xlu0 %v1380
  %v1382 = vpop.xlane.xlu0 %1381
  %v1383 = vsel %vm400, %v1364, 0.0
  %1384 = vadd.xlane.f32.xlu0 %v1383
  %v1385 = vpop.xlane.xlu0 %1384
  %v1386 = vsel %vm400, %v1366, 0.0
  %1387 = vadd.xlane.f32.xlu0 %v1386
  %v1388 = vpop.xlane.xlu0 %1387
  %v1389 = vsel %vm400, %v1368, 0.0
  %1390 = vadd.xlane.f32.xlu0 %v1389
  %v1391 = vpop.xlane.xlu0 %1390
  %v1392 = vsel %vm400, %v1370, 0.0
  %1393 = vadd.xlane.f32.xlu0 %v1392
  %v1394 = vpop.xlane.xlu0 %1393
  %v1395 = vrcp.pop %v1373
  %v1396 = vrcp.pop %v1376
  %v1397 = vrcp.pop %v1379
  %v1398 = vrcp.pop %v1382
  %v1399 = vrcp.pop %v1385
  %v1400 = vrcp.pop %v1388
  %v1401 = vrcp.pop %v1391
  %v1402 = vrcp.pop %v1394
  %v1403 = vmul.f32 %v1356, %v1395
  %v1404 = vmul.f32 %v1358, %v1396
  %v1405 = vmul.f32 %v1360, %v1397
  %v1406 = vmul.f32 %v1362, %v1398
  %v1407 = vmul.f32 %v1364, %v1399
  %v1408 = vmul.f32 %v1366, %v1400
  %v1409 = vmul.f32 %v1368, %v1401
  %v1410 = vmul.f32 %v1370, %v1402
  %v1411 = vsub.f32 0.0, %v1307
  %v1412 = vsub.f32 0.0, %v1308
  %v1413 = vsub.f32 0.0, %v1309
  %v1414 = vsub.f32 0.0, %v1310
  %v1415 = vsub.f32 0.0, %v1311
  %v1416 = vsub.f32 0.0, %v1312
  %v1417 = vsub.f32 0.0, %v1313
  %v1418 = vsub.f32 0.0, %v1314
  %v1419 = vsel %vm85, %v1411, -1e+12
  %v1420 = vsel %vm86, %v1412, -1e+12
  %v1421 = vsel %vm87, %v1413, -1e+12
  %v1422 = vsel %vm88, %v1414, -1e+12
  %v1423 = vsel %vm89, %v1415, -1e+12
  %v1424 = vsel %vm90, %v1416, -1e+12
  %v1425 = vsel %vm91, %v1417, -1e+12
  %v1426 = vsel %vm92, %v1418, -1e+12
  %v1427 = vsel %vm400, %v1419, -inf
  %1428 = vmax.xlane.f32.xlu0 %v1427
  %v1429 = vpop.xlane.xlu0 %1428
  %v1430 = vsel %vm400, %v1420, -inf
  %1431 = vmax.xlane.f32.xlu0 %v1430
  %v1432 = vpop.xlane.xlu0 %1431
  %v1433 = vsel %vm400, %v1421, -inf
  %1434 = vmax.xlane.f32.xlu0 %v1433
  %v1435 = vpop.xlane.xlu0 %1434
  %v1436 = vsel %vm400, %v1422, -inf
  %1437 = vmax.xlane.f32.xlu0 %v1436
  %v1438 = vpop.xlane.xlu0 %1437
  %v1439 = vsel %vm400, %v1423, -inf
  %1440 = vmax.xlane.f32.xlu0 %v1439
  %v1441 = vpop.xlane.xlu0 %1440
  %v1442 = vsel %vm400, %v1424, -inf
  %1443 = vmax.xlane.f32.xlu0 %v1442
  %v1444 = vpop.xlane.xlu0 %1443
  %v1445 = vsel %vm400, %v1425, -inf
  %1446 = vmax.xlane.f32.xlu0 %v1445
  %v1447 = vpop.xlane.xlu0 %1446
  %v1448 = vsel %vm400, %v1426, -inf
  %1449 = vmax.xlane.f32.xlu0 %v1448
  %v1450 = vpop.xlane.xlu0 %1449
  %v1451 = vsub.f32 %v1419, %v1429
  %v1452 = vsub.f32 %v1420, %v1432
  %v1453 = vsub.f32 %v1421, %v1435
  %v1454 = vsub.f32 %v1422, %v1438
  %v1455 = vsub.f32 %v1423, %v1441
  %v1456 = vsub.f32 %v1424, %v1444
  %v1457 = vsub.f32 %v1425, %v1447
  %v1458 = vsub.f32 %v1426, %v1450
  %v1459 = vmul.f32 %v1451, 1.442695
  %v1460 = vpow.pop %v1459
  %v1461 = vmul.f32 %v1452, 1.442695
  %v1462 = vpow.pop %v1461
  %v1463 = vmul.f32 %v1453, 1.442695
  %v1464 = vpow.pop %v1463
  %v1465 = vmul.f32 %v1454, 1.442695
  %v1466 = vpow.pop %v1465
  %v1467 = vmul.f32 %v1455, 1.442695
  %v1468 = vpow.pop %v1467
  %v1469 = vmul.f32 %v1456, 1.442695
  %v1470 = vpow.pop %v1469
  %v1471 = vmul.f32 %v1457, 1.442695
  %v1472 = vpow.pop %v1471
  %v1473 = vmul.f32 %v1458, 1.442695
  %v1474 = vpow.pop %v1473
  %v1475 = vsel %vm400, %v1460, 0.0
  %1476 = vadd.xlane.f32.xlu0 %v1475
  %v1477 = vpop.xlane.xlu0 %1476
  %v1478 = vsel %vm400, %v1462, 0.0
  %1479 = vadd.xlane.f32.xlu0 %v1478
  %v1480 = vpop.xlane.xlu0 %1479
  %v1481 = vsel %vm400, %v1464, 0.0
  %1482 = vadd.xlane.f32.xlu0 %v1481
  %v1483 = vpop.xlane.xlu0 %1482
  %v1484 = vsel %vm400, %v1466, 0.0
  %1485 = vadd.xlane.f32.xlu0 %v1484
  %v1486 = vpop.xlane.xlu0 %1485
  %v1487 = vsel %vm400, %v1468, 0.0
  %1488 = vadd.xlane.f32.xlu0 %v1487
  %v1489 = vpop.xlane.xlu0 %1488
  %v1490 = vsel %vm400, %v1470, 0.0
  %1491 = vadd.xlane.f32.xlu0 %v1490
  %v1492 = vpop.xlane.xlu0 %1491
  %v1493 = vsel %vm400, %v1472, 0.0
  %1494 = vadd.xlane.f32.xlu0 %v1493
  %v1495 = vpop.xlane.xlu0 %1494
  %v1496 = vsel %vm400, %v1474, 0.0
  %1497 = vadd.xlane.f32.xlu0 %v1496
  %v1498 = vpop.xlane.xlu0 %1497
  %v1499 = vrcp.pop %v1477
  %v1500 = vrcp.pop %v1480
  %v1501 = vrcp.pop %v1483
  %v1502 = vrcp.pop %v1486
  %v1503 = vrcp.pop %v1489
  %v1504 = vrcp.pop %v1492
  %v1505 = vrcp.pop %v1495
  %v1506 = vrcp.pop %v1498
  %v1507 = vmul.f32 %v1460, %v1499
  %v1508 = vmul.f32 %v1462, %v1500
  %v1509 = vmul.f32 %v1464, %v1501
  %v1510 = vmul.f32 %v1466, %v1502
  %v1511 = vmul.f32 %v1468, %v1503
  %v1512 = vmul.f32 %v1470, %v1504
  %v1513 = vmul.f32 %v1472, %v1505
  %v1514 = vmul.f32 %v1474, %v1506
  %v1515 = vsub.f32 0.0, %v1507
  %v1516 = vsub.f32 0.0, %v1508
  %v1517 = vsub.f32 0.0, %v1509
  %v1518 = vsub.f32 0.0, %v1510
  %v1519 = vsub.f32 0.0, %v1511
  %v1520 = vsub.f32 0.0, %v1512
  %v1521 = vsub.f32 0.0, %v1513
  %v1522 = vsub.f32 0.0, %v1514
  %v1523 = vpack.c.bf16 %v1404, %v1403
  %v1524 = vpack.c.bf16 %v1406, %v1405
  %v1525 = vpack.c.bf16 %v1408, %v1407
  %v1526 = vpack.c.bf16 %v1410, %v1409
  %v1527 = vpack.c.bf16 %v1516, %v1515
  %v1528 = vpack.c.bf16 %v1518, %v1517
  %v1529 = vpack.c.bf16 %v1520, %v1519
  %v1530 = vpack.c.bf16 %v1522, %v1521
  %v1532 = vsel %vm400, %v1523, 0
  %v1535 = vsel %vm400, %v1524, 0
  %v1538 = vsel %vm400, %v1525, 0
  %v1541 = vsel %vm400, %v1526, 0
  %v1544 = vsel %vm400, %v1527, 0
  %v1547 = vsel %vm400, %v1528, 0
  %v1550 = vsel %vm400, %v1529, 0
  %v1553 = vsel %vm400, %v1530, 0
  %1555 = vmatprep.subr.bf16.mxu0 0
  %1556 = vmatpush1.bf16.msra.mxu0 %v1044
  %1557 = vmatprep.subr.bf16.mxu0 0
  %1558 = vmatpush1.bf16.msra.mxu0 %v1045
  %1559 = vmatprep.subr.bf16.mxu0 0
  %1560 = vmatpush1.bf16.msra.mxu0 %v1046
  %1561 = vmatprep.subr.bf16.mxu0 0
  %1562 = vmatpush1.bf16.msra.mxu0 %v1047
  %1563 = vmatprep.subr.bf16.mxu0 0
  %1564 = vmatpush1.bf16.msra.mxu0 0
  %1565 = vmatprep.subr.bf16.mxu0 0
  %1566 = vmatpush1.bf16.msra.mxu0 0
  %1567 = vmatprep.subr.bf16.mxu0 0
  %1568 = vmatpush1.bf16.msra.mxu0 0
  %1569 = vmatprep.subr.bf16.mxu0 0
  %1570 = vmatpush1.bf16.msra.mxu0 0
  %1571 = vmatprep.subr.bf16.mxu0 0
  %1572 = vmatpush1.bf16.msra.mxu0 0
  %1573 = vmatprep.subr.bf16.mxu0 0
  %1574 = vmatpush1.bf16.msra.mxu0 0
  %1575 = vmatprep.subr.bf16.mxu0 0
  %1576 = vmatpush1.bf16.msra.mxu0 0
  %1577 = vmatprep.subr.bf16.mxu0 0
  %1578 = vmatpush1.bf16.msra.mxu0 0
  %1579 = vmatprep.subr.bf16.mxu0 0
  %1580 = vmatpush1.bf16.msra.mxu0 0
  %1581 = vmatprep.subr.bf16.mxu0 0
  %1582 = vmatpush1.bf16.msra.mxu0 0
  %1583 = vmatprep.subr.bf16.mxu0 0
  %1584 = vmatpush1.bf16.msra.mxu0 0
  %1585 = vmatprep.subr.bf16.mxu0 0
  %1586 = vmatpush1.bf16.msra.mxu0 0
  %1587 = vmatprep.mubr.bf16.mxu0 0
  %1588 = vmatmul.mubr.bf16.gmra.mrb[0].mxu0 %v1532
  %v1589 = vpop.f32.mrb[0].mxu0
  %v1590 = vadd.f32 0.0, %v1589
  %v1591 = vpop.f32.mrb[0].mxu0
  %v1592 = vpop.f32.mrb[0].mxu0
  %v1593 = vadd.f32 0.0, %v1592
  %v1594 = vpop.f32.mrb[0].mxu0
  %1595 = vmatprep.mubr.bf16.mxu0 0
  %1596 = vmatmul.mubr.bf16.gmra.mrb[0].mxu0 %v1535
  %v1597 = vpop.f32.mrb[0].mxu0
  %v1598 = vadd.f32 0.0, %v1597
  %v1599 = vpop.f32.mrb[0].mxu0
  %v1600 = vpop.f32.mrb[0].mxu0
  %v1601 = vadd.f32 0.0, %v1600
  %v1602 = vpop.f32.mrb[0].mxu0
  %1603 = vmatprep.mubr.bf16.mxu0 0
  %1604 = vmatmul.mubr.bf16.gmra.mrb[0].mxu0 %v1538
  %v1605 = vpop.f32.mrb[0].mxu0
  %v1606 = vadd.f32 0.0, %v1605
  %v1607 = vpop.f32.mrb[0].mxu0
  %v1608 = vpop.f32.mrb[0].mxu0
  %v1609 = vadd.f32 0.0, %v1608
  %v1610 = vpop.f32.mrb[0].mxu0
  %1611 = vmatprep.mubr.bf16.mxu0 0
  %1612 = vmatmul.mubr.bf16.gmra.mrb[0].mxu0 %v1541
  %v1613 = vpop.f32.mrb[0].mxu0
  %v1614 = vadd.f32 0.0, %v1613
  %v1615 = vpop.f32.mrb[0].mxu0
  %v1616 = vpop.f32.mrb[0].mxu0
  %v1617 = vadd.f32 0.0, %v1616
  %v1618 = vpop.f32.mrb[0].mxu0
  %1619 = vmatprep.mubr.bf16.mxu0 0
  %1620 = vmatmul.mubr.bf16.gmra.mrb[0].mxu0 %v1544
  %v1621 = vpop.f32.mrb[0].mxu0
  %v1622 = vadd.f32 0.0, %v1621
  %v1623 = vpop.f32.mrb[0].mxu0
  %v1624 = vpop.f32.mrb[0].mxu0
  %v1625 = vadd.f32 0.0, %v1624
  %v1626 = vpop.f32.mrb[0].mxu0
  %1627 = vmatprep.mubr.bf16.mxu0 0
  %1628 = vmatmul.mubr.bf16.gmra.mrb[0].mxu0 %v1547
  %v1629 = vpop.f32.mrb[0].mxu0
  %v1630 = vadd.f32 0.0, %v1629
  %v1631 = vpop.f32.mrb[0].mxu0
  %v1632 = vpop.f32.mrb[0].mxu0
  %v1633 = vadd.f32 0.0, %v1632
  %v1634 = vpop.f32.mrb[0].mxu0
  %1635 = vmatprep.mubr.bf16.mxu0 0
  %1636 = vmatmul.mubr.bf16.gmra.mrb[0].mxu0 %v1550
  %v1637 = vpop.f32.mrb[0].mxu0
  %v1638 = vadd.f32 0.0, %v1637
  %v1639 = vpop.f32.mrb[0].mxu0
  %v1640 = vpop.f32.mrb[0].mxu0
  %v1641 = vadd.f32 0.0, %v1640
  %v1642 = vpop.f32.mrb[0].mxu0
  %1643 = vmatprep.mubr.bf16.mxu0 0
  %1644 = vmatmul.mubr.bf16.gmra.mrb[0].mxu0 %v1553
  %v1645 = vpop.f32.mrb[0].mxu0
  %v1646 = vadd.f32 0.0, %v1645
  %v1647 = vpop.f32.mrb[0].mxu0
  %v1648 = vpop.f32.mrb[0].mxu0
  %v1649 = vadd.f32 0.0, %v1648
  %v1650 = vpop.f32.mrb[0].mxu0
  %1651 = vdwg.mxu0
  %v1652 = vpack.c.bf16 %v1593, %v1590
  %v1653 = vpack.c.bf16 %v1601, %v1598
  %v1654 = vpack.c.bf16 %v1609, %v1606
  %v1655 = vpack.c.bf16 %v1617, %v1614
  %v1656 = vld [vmem:[%s11] sm:$0xf]
  %v1657 = vld [vmem:[%s11 + $0x4] sm:$0xf]
  %v1658 = vld [vmem:[%s11 + $0x8] sm:$0xf]
  %v1659 = vld [vmem:[%s11 + $0xc] sm:$0xf]
  %v1660 = vld [vmem:[%s11 + $0x10] sm:$0xf]
  %v1661 = vld [vmem:[%s11 + $0x14] sm:$0xf]
  %v1662 = vld [vmem:[%s11 + $0x18] sm:$0xf]
  %v1663 = vld [vmem:[%s11 + $0x1c] sm:$0xf]
  %v1664 = vld [vmem:[%s11 + $0x20] sm:$0xf]
  %v1665 = vld [vmem:[%s11 + $0x24] sm:$0xf]
  %v1666 = vld [vmem:[%s11 + $0x28] sm:$0xf]
  %v1667 = vld [vmem:[%s11 + $0x2c] sm:$0xf]
  %v1668 = vld [vmem:[%s11 + $0x30] sm:$0xf]
  %v1669 = vld [vmem:[%s11 + $0x34] sm:$0xf]
  %v1670 = vld [vmem:[%s11 + $0x38] sm:$0xf]
  %v1671 = vld [vmem:[%s11 + $0x3c] sm:$0xf]
  %v1672 = vpack.c.bf16 %v1625, %v1622
  %v1673 = vpack.c.bf16 %v1633, %v1630
  %v1674 = vpack.c.bf16 %v1641, %v1638
  %v1675 = vpack.c.bf16 %v1649, %v1646
  %v1676 = vld [vmem:[%s12] sm:$0xf]
  %v1677 = vld [vmem:[%s12 + $0x4] sm:$0xf]
  %v1678 = vld [vmem:[%s12 + $0x8] sm:$0xf]
  %v1679 = vld [vmem:[%s12 + $0xc] sm:$0xf]
  %v1680 = vld [vmem:[%s12 + $0x10] sm:$0xf]
  %v1681 = vld [vmem:[%s12 + $0x14] sm:$0xf]
  %v1682 = vld [vmem:[%s12 + $0x18] sm:$0xf]
  %v1683 = vld [vmem:[%s12 + $0x1c] sm:$0xf]
  %v1684 = vld [vmem:[%s12 + $0x20] sm:$0xf]
  %v1685 = vld [vmem:[%s12 + $0x24] sm:$0xf]
  %v1686 = vld [vmem:[%s12 + $0x28] sm:$0xf]
  %v1687 = vld [vmem:[%s12 + $0x2c] sm:$0xf]
  %v1688 = vld [vmem:[%s12 + $0x30] sm:$0xf]
  %v1689 = vld [vmem:[%s12 + $0x34] sm:$0xf]
  %v1690 = vld [vmem:[%s12 + $0x38] sm:$0xf]
  %v1691 = vld [vmem:[%s12 + $0x3c] sm:$0xf]
  %v1708 = vunpack.c.l.b16 %v1676
  %v1709 = vunpack.c.l.b16 %v1677
  %v1710 = vunpack.c.l.b16 %v1678
  %v1711 = vunpack.c.l.b16 %v1679
  %v1712 = vunpack.c.l.b16 %v1680
  %v1713 = vunpack.c.l.b16 %v1681
  %v1714 = vunpack.c.l.b16 %v1682
  %v1715 = vunpack.c.l.b16 %v1683
  %v1716 = vunpack.c.l.b16 %v1684
  %v1717 = vunpack.c.l.b16 %v1685
  %v1718 = vunpack.c.l.b16 %v1686
  %v1719 = vunpack.c.l.b16 %v1687
  %v1720 = vunpack.c.l.b16 %v1688
  %v1721 = vunpack.c.l.b16 %v1689
  %v1722 = vunpack.c.l.b16 %v1690
  %v1723 = vunpack.c.l.b16 %v1691
  %v1724 = vpack.c.b16 %v1709, %v1708
  %v1725 = vpack.c.b16 %v1711, %v1710
  %v1726 = vpack.c.b16 %v1713, %v1712
  %v1727 = vpack.c.b16 %v1715, %v1714
  %v1728 = vpack.c.b16 %v1717, %v1716
  %v1729 = vpack.c.b16 %v1719, %v1718
  %v1730 = vpack.c.b16 %v1721, %v1720
  %v1731 = vpack.c.b16 %v1723, %v1722
  %1740 = vmatprep.subr.bf16.mxu0 0
  %1741 = vmatpush1.bf16.msra.mxu0 %v1724
  %1742 = vmatprep.subr.bf16.mxu0 0
  %1743 = vmatpush1.bf16.msra.mxu0 %v1725
  %1744 = vmatprep.subr.bf16.mxu0 0
  %1745 = vmatpush1.bf16.msra.mxu0 %v1726
  %1746 = vmatprep.subr.bf16.mxu0 0
  %1747 = vmatpush1.bf16.msra.mxu0 %v1727
  %1748 = vmatprep.subr.bf16.mxu0 0
  %1749 = vmatpush1.bf16.msra.mxu0 %v1728
  %1750 = vmatprep.subr.bf16.mxu0 0
  %1751 = vmatpush1.bf16.msra.mxu0 %v1729
  %1752 = vmatprep.subr.bf16.mxu0 0
  %1753 = vmatpush1.bf16.msra.mxu0 %v1730
  %1754 = vmatprep.subr.bf16.mxu0 0
  %1755 = vmatpush1.bf16.msra.mxu0 %v1731
  %1756 = vmatprep.subr.bf16.mxu0 0
  %1757 = vmatpush1.bf16.msra.mxu0 0
  %1758 = vmatprep.subr.bf16.mxu0 0
  %1759 = vmatpush1.bf16.msra.mxu0 0
  %1760 = vmatprep.subr.bf16.mxu0 0
  %1761 = vmatpush1.bf16.msra.mxu0 0
  %1762 = vmatprep.subr.bf16.mxu0 0
  %1763 = vmatpush1.bf16.msra.mxu0 0
  %1764 = vmatprep.subr.bf16.mxu0 0
  %1765 = vmatpush1.bf16.msra.mxu0 0
  %1766 = vmatprep.subr.bf16.mxu0 0
  %1767 = vmatpush1.bf16.msra.mxu0 0
  %1768 = vmatprep.subr.bf16.mxu0 0
  %1769 = vmatpush1.bf16.msra.mxu0 0
  %1770 = vmatprep.subr.bf16.mxu0 0
  %1771 = vmatpush1.bf16.msra.mxu0 0
  %1772 = vmatprep.mubr.bf16.mxu0 0
  %1773 = vmatmul.mubr.bf16.gmra.mrb[0].mxu0 %v1672
  %v1774 = vpop.f32.mrb[0].mxu0
  %v1775 = vadd.f32 0.0, %v1774
  %v1776 = vpop.f32.mrb[0].mxu0
  %v1777 = vpop.f32.mrb[0].mxu0
  %v1778 = vadd.f32 0.0, %v1777
  %v1779 = vpop.f32.mrb[0].mxu0
  %1780 = vmatprep.mubr.bf16.mxu0 0
  %1781 = vmatmul.mubr.bf16.gmra.mrb[0].mxu0 %v1673
  %v1782 = vpop.f32.mrb[0].mxu0
  %v1783 = vadd.f32 0.0, %v1782
  %v1784 = vpop.f32.mrb[0].mxu0
  %v1785 = vpop.f32.mrb[0].mxu0
  %v1786 = vadd.f32 0.0, %v1785
  %v1787 = vpop.f32.mrb[0].mxu0
  %1788 = vmatprep.mubr.bf16.mxu0 0
  %1789 = vmatmul.mubr.bf16.gmra.mrb[0].mxu0 %v1674
  %v1790 = vpop.f32.mrb[0].mxu0
  %v1791 = vadd.f32 0.0, %v1790
  %v1792 = vpop.f32.mrb[0].mxu0
  %v1793 = vpop.f32.mrb[0].mxu0
  %v1794 = vadd.f32 0.0, %v1793
  %v1795 = vpop.f32.mrb[0].mxu0
  %1796 = vmatprep.mubr.bf16.mxu0 0
  %1797 = vmatmul.mubr.bf16.gmra.mrb[0].mxu0 %v1675
  %v1798 = vpop.f32.mrb[0].mxu0
  %v1799 = vadd.f32 0.0, %v1798
  %v1800 = vpop.f32.mrb[0].mxu0
  %v1801 = vpop.f32.mrb[0].mxu0
  %v1802 = vadd.f32 0.0, %v1801
  %v1803 = vpop.f32.mrb[0].mxu0
  %1804 = vdwg.mxu0
  %v1821 = vunpack.c.l.b16 %v1656
  %v1822 = vunpack.c.l.b16 %v1657
  %v1823 = vunpack.c.l.b16 %v1658
  %v1824 = vunpack.c.l.b16 %v1659
  %v1825 = vunpack.c.l.b16 %v1660
  %v1826 = vunpack.c.l.b16 %v1661
  %v1827 = vunpack.c.l.b16 %v1662
  %v1828 = vunpack.c.l.b16 %v1663
  %v1829 = vunpack.c.l.b16 %v1664
  %v1830 = vunpack.c.l.b16 %v1665
  %v1831 = vunpack.c.l.b16 %v1666
  %v1832 = vunpack.c.l.b16 %v1667
  %v1833 = vunpack.c.l.b16 %v1668
  %v1834 = vunpack.c.l.b16 %v1669
  %v1835 = vunpack.c.l.b16 %v1670
  %v1836 = vunpack.c.l.b16 %v1671
  %v1837 = vpack.c.b16 %v1822, %v1821
  %v1838 = vpack.c.b16 %v1824, %v1823
  %v1839 = vpack.c.b16 %v1826, %v1825
  %v1840 = vpack.c.b16 %v1828, %v1827
  %v1841 = vpack.c.b16 %v1830, %v1829
  %v1842 = vpack.c.b16 %v1832, %v1831
  %v1843 = vpack.c.b16 %v1834, %v1833
  %v1844 = vpack.c.b16 %v1836, %v1835
  %1853 = vmatprep.subr.bf16.mxu0 0
  %1854 = vmatpush1.bf16.msra.mxu0 %v1837
  %1855 = vmatprep.subr.bf16.mxu0 0
  %1856 = vmatpush1.bf16.msra.mxu0 %v1838
  %1857 = vmatprep.subr.bf16.mxu0 0
  %1858 = vmatpush1.bf16.msra.mxu0 %v1839
  %1859 = vmatprep.subr.bf16.mxu0 0
  %1860 = vmatpush1.bf16.msra.mxu0 %v1840
  %1861 = vmatprep.subr.bf16.mxu0 0
  %1862 = vmatpush1.bf16.msra.mxu0 %v1841
  %1863 = vmatprep.subr.bf16.mxu0 0
  %1864 = vmatpush1.bf16.msra.mxu0 %v1842
  %1865 = vmatprep.subr.bf16.mxu0 0
  %1866 = vmatpush1.bf16.msra.mxu0 %v1843
  %1867 = vmatprep.subr.bf16.mxu0 0
  %1868 = vmatpush1.bf16.msra.mxu0 %v1844
  %1869 = vmatprep.subr.bf16.mxu0 0
  %1870 = vmatpush1.bf16.msra.mxu0 0
  %1871 = vmatprep.subr.bf16.mxu0 0
  %1872 = vmatpush1.bf16.msra.mxu0 0
  %1873 = vmatprep.subr.bf16.mxu0 0
  %1874 = vmatpush1.bf16.msra.mxu0 0
  %1875 = vmatprep.subr.bf16.mxu0 0
  %1876 = vmatpush1.bf16.msra.mxu0 0
  %1877 = vmatprep.subr.bf16.mxu0 0
  %1878 = vmatpush1.bf16.msra.mxu0 0
  %1879 = vmatprep.subr.bf16.mxu0 0
  %1880 = vmatpush1.bf16.msra.mxu0 0
  %1881 = vmatprep.subr.bf16.mxu0 0
  %1882 = vmatpush1.bf16.msra.mxu0 0
  %1883 = vmatprep.subr.bf16.mxu0 0
  %1884 = vmatpush1.bf16.msra.mxu0 0
  %1885 = vmatprep.mubr.bf16.mxu0 0
  %1886 = vmatmul.mubr.bf16.gmra.mrb[0].mxu0 %v1652
  %v1887 = vpop.f32.mrb[0].mxu0
  %v1888 = vadd.f32 %v1775, %v1887
  %v1889 = vpop.f32.mrb[0].mxu0
  %v1890 = vpop.f32.mrb[0].mxu0
  %v1891 = vadd.f32 %v1778, %v1890
  %v1892 = vpop.f32.mrb[0].mxu0
  %1893 = vmatprep.mubr.bf16.mxu0 0
  %1894 = vmatmul.mubr.bf16.gmra.mrb[0].mxu0 %v1653
  %v1895 = vpop.f32.mrb[0].mxu0
  %v1896 = vadd.f32 %v1783, %v1895
  %v1897 = vpop.f32.mrb[0].mxu0
  %v1898 = vpop.f32.mrb[0].mxu0
  %v1899 = vadd.f32 %v1786, %v1898
  %v1900 = vpop.f32.mrb[0].mxu0
  %1901 = vmatprep.mubr.bf16.mxu0 0
  %1902 = vmatmul.mubr.bf16.gmra.mrb[0].mxu0 %v1654
  %v1903 = vpop.f32.mrb[0].mxu0
  %v1904 = vadd.f32 %v1791, %v1903
  %v1905 = vpop.f32.mrb[0].mxu0
  %v1906 = vpop.f32.mrb[0].mxu0
  %v1907 = vadd.f32 %v1794, %v1906
  %v1908 = vpop.f32.mrb[0].mxu0
  %1909 = vmatprep.mubr.bf16.mxu0 0
  %1910 = vmatmul.mubr.bf16.gmra.mrb[0].mxu0 %v1655
  %v1911 = vpop.f32.mrb[0].mxu0
  %v1912 = vadd.f32 %v1799, %v1911
  %v1913 = vpop.f32.mrb[0].mxu0
  %v1914 = vpop.f32.mrb[0].mxu0
  %v1915 = vadd.f32 %v1802, %v1914
  %v1916 = vpop.f32.mrb[0].mxu0
  %1917 = vdwg.mxu0
  %v1918 = vsub.f32 0.0, %v1888
  %v1919 = vsub.f32 0.0, %v1891
  %v1920 = vsub.f32 0.0, %v1896
  %v1921 = vsub.f32 0.0, %v1899
  %v1922 = vsub.f32 0.0, %v1904
  %v1923 = vsub.f32 0.0, %v1907
  %v1924 = vsub.f32 0.0, %v1912
  %v1925 = vsub.f32 0.0, %v1915
  %v1926 = vmul.f32 %v1918, 1.442695
  %v1927 = vpow.pop %v1926
  %v1928 = vmul.f32 %v1919, 1.442695
  %v1929 = vpow.pop %v1928
  %v1930 = vmul.f32 %v1920, 1.442695
  %v1931 = vpow.pop %v1930
  %v1932 = vmul.f32 %v1921, 1.442695
  %v1933 = vpow.pop %v1932
  %v1934 = vmul.f32 %v1922, 1.442695
  %v1935 = vpow.pop %v1934
  %v1936 = vmul.f32 %v1923, 1.442695
  %v1937 = vpow.pop %v1936
  %v1938 = vmul.f32 %v1924, 1.442695
  %v1939 = vpow.pop %v1938
  %v1940 = vmul.f32 %v1925, 1.442695
  %v1941 = vpow.pop %v1940
  %v1942 = vadd.f32 %v1927, 1.0
  %v1943 = vadd.f32 %v1929, 1.0
  %v1944 = vadd.f32 %v1931, 1.0
  %v1945 = vadd.f32 %v1933, 1.0
  %v1946 = vadd.f32 %v1935, 1.0
  %v1947 = vadd.f32 %v1937, 1.0
  %v1948 = vadd.f32 %v1939, 1.0
  %v1949 = vadd.f32 %v1941, 1.0
  %v1950 = vrcp.pop %v1942
  %v1951 = vmul.f32 1.0, %v1950
  %v1952 = vrcp.pop %v1943
  %v1953 = vmul.f32 1.0, %v1952
  %v1954 = vrcp.pop %v1944
  %v1955 = vmul.f32 1.0, %v1954
  %v1956 = vrcp.pop %v1945
  %v1957 = vmul.f32 1.0, %v1956
  %v1958 = vrcp.pop %v1946
  %v1959 = vmul.f32 1.0, %v1958
  %v1960 = vrcp.pop %v1947
  %v1961 = vmul.f32 1.0, %v1960
  %v1962 = vrcp.pop %v1948
  %v1963 = vmul.f32 1.0, %v1962
  %v1964 = vrcp.pop %v1949
  %v1965 = vmul.f32 1.0, %v1964
  %1966 = vst [vmem:[%s13] sm:$0xff] %v1951
  %1967 = vst [vmem:[%s13 + $0x8] sm:$0xff] %v1953
  %1968 = vst [vmem:[%s13 + $0x10] sm:$0xff] %v1955
  %1969 = vst [vmem:[%s13 + $0x18] sm:$0xff] %v1957
  %1970 = vst [vmem:[%s13 + $0x20] sm:$0xff] %v1959
  %1971 = vst [vmem:[%s13 + $0x28] sm:$0xff] %v1961
  %1972 = vst [vmem:[%s13 + $0x30] sm:$0xff] %v1963
  %1973 = vst [vmem:[%s13 + $0x38] sm:$0xff] %v1965
  // Predicated region
  $region54: #{signed_gat_forward.1} parent=0 // pred_check
    _
  $region55: #{signed_gat_forward.1} parent=0 // pred_check_branch
    %1975 = sbr.rel (0) target = $region57
  $region56: #{signed_gat_forward.1} parent=0 // pred_region
    _
  $region57: #{signed_gat_forward.1} parent=0 // pred_fallthru
    _
  // Predicated region
  $region58: #{signed_gat_forward.1} parent=0 // pred_check
    _
  $region59: #{signed_gat_forward.1} parent=0 // pred_check_branch
    %1977 = sbr.rel (0) target = $region61
  $region60: #{signed_gat_forward.1} parent=0 // pred_region
    _
  $region61: #{signed_gat_forward.1} parent=0 // pred_fallthru
    _

</llo_original>
